<compile_context>
chip_gen: v6e
topology: v6e:2x2x1
jax: 0.10.0
libtpu: 0.0.40
codegen_flags: <defaults>
</compile_context>

<pallas_src>
import functools

import numpy as np
import jax
import jax.numpy as jnp
from jax import lax
from jax.experimental import pallas as pl
from jax.experimental.pallas import tpu as pltpu


def _round_up(x, m):
    return (x + m - 1) // m * m


def brnn_kernel(ids_ref,    # (T*Bp, 1) int32  token ids (batch-padded, seq-major flattened)
                emb_ref,    # (Vp, E)          embedding table (rows zero-padded to Vp)
                wih_ref,    # (E, 8H)          [W_ih_fwd | W_ih_bwd], gate order [i,f,g,o]
                whh_ref,    # (2H, 8H)         block-diag([W_hh_fwd, W_hh_bwd])
                b_ref,      # (1, 8H) f32      [b_ih_f+b_hh_f | b_ih_b+b_hh_b]
                wfc_ref,    # (2H, Op) f32     fc weight, columns zero-padded to Op
                bfc_ref,    # (1, Op)  f32     fc bias, zero-padded
                out_ref):   # (Bp, Op) f32     sigmoid(fc(hidden)), padded cols sliced by wrapper
    TB = ids_ref.shape[0]
    Vp = emb_ref.shape[0]
    H8 = wih_ref.shape[1]
    H = H8 // 8
    H4 = 4 * H
    Bp = out_ref.shape[0]
    T = TB // Bp
    mm_dtype = emb_ref.dtype

    # ---- fused embedding gather: one-hot(ids) @ table (exact: one-hot entries are 0/1) ----
    ids = ids_ref[...]                                              # (T*Bp, 1) int32
    iota_v = lax.broadcasted_iota(jnp.int32, (TB, Vp), 1)
    onehot = jnp.where(iota_v == ids, 1.0, 0.0).astype(mm_dtype)    # (T*Bp, Vp)
    x_emb = jnp.dot(onehot, emb_ref[...],
                    preferred_element_type=jnp.float32)             # (T*Bp, E) f32

    # ---- hoisted input projection for all timesteps / both directions, biases folded ----
    x_proj = jnp.dot(x_emb.astype(mm_dtype), wih_ref[...],
                     preferred_element_type=jnp.float32) + b_ref[...]   # (T*Bp, 8H) f32

    whh = whh_ref[...]                                              # (2H, 8H)

    h_f = jnp.zeros((Bp, H), jnp.float32)
    h_b = jnp.zeros((Bp, H), jnp.float32)
    c_f = jnp.zeros((Bp, H), jnp.float32)
    c_b = jnp.zeros((Bp, H), jnp.float32)

    # ---- fused, fully-unrolled bidirectional recurrence (one h@W_hh matmul per step) ----
    for k in range(T):
        tf = k            # forward direction processes t = 0 .. T-1
        tb = T - 1 - k    # backward direction processes t = T-1 .. 0
        xk = jnp.concatenate(
            [x_proj[tf * Bp:(tf + 1) * Bp, :H4],      # fwd gate pre-activations @ time tf
             x_proj[tb * Bp:(tb + 1) * Bp, H4:]],     # bwd gate pre-activations @ time tb
            axis=1)                                   # (Bp, 8H) f32
        h_cat = jnp.concatenate([h_f, h_b], axis=1)   # (Bp, 2H) f32
        gates = xk + jnp.dot(h_cat.astype(mm_dtype), whh,
                             preferred_element_type=jnp.float32)    # (Bp, 8H) f32

        sig = jax.nn.sigmoid(gates)   # full-tile EUP work; i/f/o lanes are the valid ones
        tnh = jnp.tanh(gates)         # full-tile EUP work; g lanes are the valid ones
        i_f = sig[:, 0:H]
        f_f = sig[:, H:2 * H]
        g_f = tnh[:, 2 * H:3 * H]
        o_f = sig[:, 3 * H:4 * H]
        i_b = sig[:, H4:H4 + H]
        f_b = sig[:, H4 + H:H4 + 2 * H]
        g_b = tnh[:, H4 + 2 * H:H4 + 3 * H]
        o_b = sig[:, H4 + 3 * H:]

        c_f = f_f * c_f + i_f * g_f
        c_b = f_b * c_b + i_b * g_b
        h_f = o_f * jnp.tanh(c_f)
        h_b = o_b * jnp.tanh(c_b)

    # hidden = cat(hidden[-2], hidden[-1], dim=1) -> (Bp, 2H); prediction = sigmoid(fc(hidden))
    hcat = jnp.concatenate([h_f, h_b], axis=1)
    logits = jnp.dot(hcat, wfc_ref[...], preferred_element_type=jnp.float32) + bfc_ref[...]
    out_ref[...] = jax.nn.sigmoid(logits)


@functools.partial(jax.jit, static_argnames=("output_dim", "matmul_dtype"))
def brnn_forward(x_tokens, params, output_dim, matmul_dtype=jnp.bfloat16):
    """x_tokens: (seq_len, batch) int32 (seq-first, like nn.LSTM default).
    Returns (batch, output_dim) float32."""
    emb = params["embedding"]                      # (V, E)
    V, _ = emb.shape
    H = params["w_hh_f"].shape[0]
    T, B = x_tokens.shape

    Bp = _round_up(max(B, 8), 8)                   # sublane-friendly padded batch
    Vp = _round_up(V, 16)                          # sublane-friendly padded vocab
    Op = _round_up(max(output_dim, 128), 128)      # lane-dense output

    # ---- tiny pure-JAX parameter packing (traced once per jitted call) ----
    emb_p = jnp.pad(emb, ((0, Vp - V), (0, 0))).astype(matmul_dtype)
    wih_cat = jnp.concatenate(
        [params["w_ih_f"], params["w_ih_b"]], axis=1).astype(matmul_dtype)       # (E, 8H)
    zH = jnp.zeros((H, 4 * H), jnp.float32)
    whh_bd = jnp.concatenate(
        [jnp.concatenate([params["w_hh_f"], zH], axis=1),
         jnp.concatenate([zH, params["w_hh_b"]], axis=1)],
        axis=0).astype(matmul_dtype)                                             # (2H, 8H)
    b_f = params["b_ih_f"] + params["b_hh_f"]                                    # (1, 4H)
    b_b = params["b_ih_b"] + params["b_hh_b"]                                    # (1, 4H)
    b_cat = jnp.concatenate([b_f, b_b], axis=1)                                  # (1, 8H) f32
    wfc_p = jnp.pad(params["w_fc"], ((0, 0), (0, Op - output_dim)))              # (2H, Op)
    bfc_p = jnp.pad(params["b_fc"], ((0, 0), (0, Op - output_dim)))              # (1, Op)

    # ---- token ids: pad batch, flatten seq-major (embedding gather happens in-kernel) ----
    ids = jnp.pad(x_tokens, ((0, 0), (0, Bp - B))).reshape(T * Bp, 1).astype(jnp.int32)

    vmem = pl.BlockSpec(memory_space=pltpu.MemorySpace.VMEM)
    out_p = pl.pallas_call(
        brnn_kernel,
        out_shape=jax.ShapeDtypeStruct((Bp, Op), jnp.float32),
        in_specs=[vmem] * 7,
        out_specs=vmem,
    )(ids, emb_p, wih_cat, whh_bd, b_cat, wfc_p, bfc_p)
    return out_p[:B, :output_dim]


def init_params(key, input_dim, embedding_dim, hidden_dim, output_dim):
    """Mirrors the PyTorch module's parameters (LSTM weights stored transposed: (in, 4H))."""
    ks = jax.random.split(key, 12)
    s = 0.1
    H4 = 4 * hidden_dim
    params = {
        # nn.Embedding(input_dim, embedding_dim)
        "embedding": s * jax.random.normal(ks[0], (input_dim, embedding_dim), jnp.float32),
        # nn.LSTM forward direction, gate order [i, f, g, o]
        "w_ih_f": s * jax.random.normal(ks[1], (embedding_dim, H4), jnp.float32),
        "w_hh_f": s * jax.random.normal(ks[2], (hidden_dim, H4), jnp.float32),
        "b_ih_f": s * jax.random.normal(ks[3], (1, H4), jnp.float32),
        "b_hh_f": s * jax.random.normal(ks[4], (1, H4), jnp.float32),
        # nn.LSTM reverse direction
        "w_ih_b": s * jax.random.normal(ks[5], (embedding_dim, H4), jnp.float32),
        "w_hh_b": s * jax.random.normal(ks[6], (hidden_dim, H4), jnp.float32),
        "b_ih_b": s * jax.random.normal(ks[7], (1, H4), jnp.float32),
        "b_hh_b": s * jax.random.normal(ks[8], (1, H4), jnp.float32),
        # nn.Linear(hidden_dim * 2, output_dim) (stored transposed: (2H, O))
        "w_fc": s * jax.random.normal(ks[9], (2 * hidden_dim, output_dim), jnp.float32),
        "b_fc": s * jax.random.normal(ks[10], (1, output_dim), jnp.float32),
    }
    return params


def brnn_reference(x_tokens, params):
    """Pure-JAX f32 reference matching PyTorch bidirectional nn.LSTM semantics."""
    emb = jnp.take(params["embedding"], x_tokens, axis=0)   # (T, B, E)
    T, B, _ = emb.shape
    H = params["w_hh_f"].shape[0]

    def step(h, c, x_t, wih, whh, b):
        gates = x_t @ wih + h @ whh + b
        i = jax.nn.sigmoid(gates[:, 0 * H:1 * H])
        f = jax.nn.sigmoid(gates[:, 1 * H:2 * H])
        g = jnp.tanh(gates[:, 2 * H:3 * H])
        o = jax.nn.sigmoid(gates[:, 3 * H:4 * H])
        c = f * c + i * g
        h = o * jnp.tanh(c)
        return h, c

    h0 = jnp.zeros((B, H), jnp.float32)
    c0 = jnp.zeros((B, H), jnp.float32)
    bf = params["b_ih_f"] + params["b_hh_f"]
    bb = params["b_ih_b"] + params["b_hh_b"]
    hf, cf = h0, c0
    for t in range(T):
        hf, cf = step(hf, cf, emb[t], params["w_ih_f"], params["w_hh_f"], bf)
    hb, cb = h0, c0
    for t in range(T - 1, -1, -1):
        hb, cb = step(hb, cb, emb[t], params["w_ih_b"], params["w_hh_b"], bb)
    hidden = jnp.concatenate([hf, hb], axis=1)
    return jax.nn.sigmoid(hidden @ params["w_fc"] + params["b_fc"])


if __name__ == "__main__":
    input_dim = 50        # vocab size
    embedding_dim = 32
    hidden_dim = 32       # 4H = 128 -> lane-aligned per-direction gate block
    output_dim = 4
    seq_len = 8
    batch = 2

    key = jax.random.PRNGKey(0)
    k_param, k_x = jax.random.split(key)
    params = init_params(k_param, input_dim, embedding_dim, hidden_dim, output_dim)
    x = jax.random.randint(k_x, (seq_len, batch), 0, input_dim, dtype=jnp.int32)

    pred = brnn_forward(x, params, output_dim)   # bf16 matmul operands, f32 accumulation/state
    jax.block_until_ready(pred)
    assert pred.shape == (batch, output_dim)
    assert bool(jnp.all(jnp.isfinite(pred)))

    ref = brnn_reference(x, params)
    err = float(np.max(np.abs(np.asarray(pred) - np.asarray(ref))))
    assert err < 1e-2, f"kernel vs reference max abs err {err}"

    print("KERNEL_OK")
</pallas_src>

<mosaic_0001>
module attributes {stable_mosaic.version = 11 : i64} {
  func.func @brnn_kernel(%arg0: memref<64x1xi32, #tpu.memory_space<vmem>>, %arg1: memref<64x32xbf16, #tpu.memory_space<vmem>>, %arg2: memref<32x256xbf16, #tpu.memory_space<vmem>>, %arg3: memref<64x256xbf16, #tpu.memory_space<vmem>>, %arg4: memref<1x256xf32, #tpu.memory_space<vmem>>, %arg5: memref<64x128xf32, #tpu.memory_space<vmem>>, %arg6: memref<1x128xf32, #tpu.memory_space<vmem>>, %arg7: memref<8x128xf32, #tpu.memory_space<vmem>>) attributes {dimension_semantics = [], scalar_prefetch = 0 : i64, scratch_operands = 0 : i64, tpu.core_type = #tpu.core_type<tc>} {
    %c0 = arith.constant 0 : index
    %c0_0 = arith.constant 0 : index
    %0 = vector.load %arg0[%c0, %c0_0] : memref<64x1xi32, #tpu.memory_space<vmem>>, vector<64x1xi32>
    %1 = tpu.iota {dimensions = array<i32: 1>} : vector<64x64xi32>
    %2 = vector.broadcast %0 : vector<64x1xi32> to vector<64x64xi32>
    %3 = arith.cmpi eq, %1, %2 : vector<64x64xi32>
    %cst = arith.constant 1.000000e+00 : f32
    %cst_1 = arith.constant 0.000000e+00 : f32
    %4 = vector.broadcast %cst : f32 to vector<64x64xf32>
    %5 = vector.broadcast %cst_1 : f32 to vector<64x64xf32>
    %6 = arith.select %3, %4, %5 : vector<64x64xi1>, vector<64x64xf32>
    %7 = arith.truncf %6 : vector<64x64xf32> to vector<64x64xbf16>
    %c0_2 = arith.constant 0 : index
    %c0_3 = arith.constant 0 : index
    %8 = vector.load %arg1[%c0_2, %c0_3] : memref<64x32xbf16, #tpu.memory_space<vmem>>, vector<64x32xbf16>
    %cst_4 = arith.constant dense<0.000000e+00> : vector<64x32xf32>
    %9 = tpu.matmul %7, %8, %cst_4 {dimension_numbers = #tpu.dot_dimension_numbers<[1], [0], [0], [1], [0, 0, 1, 1], [], []>} : vector<64x64xbf16>, vector<64x32xbf16>, vector<64x32xf32> -> vector<64x32xf32>
    %10 = arith.truncf %9 : vector<64x32xf32> to vector<64x32xbf16>
    %c0_5 = arith.constant 0 : index
    %c0_6 = arith.constant 0 : index
    %11 = vector.load %arg2[%c0_5, %c0_6] : memref<32x256xbf16, #tpu.memory_space<vmem>>, vector<32x256xbf16>
    %cst_7 = arith.constant dense<0.000000e+00> : vector<64x256xf32>
    %12 = tpu.matmul %10, %11, %cst_7 {dimension_numbers = #tpu.dot_dimension_numbers<[1], [0], [0], [1], [0, 0, 1, 1], [], []>} : vector<64x32xbf16>, vector<32x256xbf16>, vector<64x256xf32> -> vector<64x256xf32>
    %c0_8 = arith.constant 0 : index
    %c0_9 = arith.constant 0 : index
    %13 = vector.load %arg4[%c0_8, %c0_9] : memref<1x256xf32, #tpu.memory_space<vmem>>, vector<1x256xf32>
    %14 = vector.broadcast %13 : vector<1x256xf32> to vector<64x256xf32>
    %15 = arith.addf %12, %14 : vector<64x256xf32>
    %c0_10 = arith.constant 0 : index
    %c0_11 = arith.constant 0 : index
    %16 = vector.load %arg3[%c0_10, %c0_11] : memref<64x256xbf16, #tpu.memory_space<vmem>>, vector<64x256xbf16>
    %cst_12 = arith.constant 0.000000e+00 : f32
    %17 = vector.broadcast %cst_12 : f32 to vector<8x32xf32>
    %cst_13 = arith.constant 0.000000e+00 : f32
    %18 = vector.broadcast %cst_13 : f32 to vector<8x32xf32>
    %cst_14 = arith.constant 0.000000e+00 : f32
    %19 = vector.broadcast %cst_14 : f32 to vector<8x32xf32>
    %cst_15 = arith.constant 0.000000e+00 : f32
    %20 = vector.broadcast %cst_15 : f32 to vector<8x32xf32>
    %21 = vector.extract_strided_slice %15 {offsets = [0, 0], sizes = [8, 128], strides = [1, 1]} : vector<64x256xf32> to vector<8x128xf32>
    %22 = vector.extract_strided_slice %15 {offsets = [56, 128], sizes = [8, 128], strides = [1, 1]} : vector<64x256xf32> to vector<8x128xf32>
    %23 = tpu.concatenate %21, %22 in 1 : vector<8x128xf32>, vector<8x128xf32> -> vector<8x256xf32>
    %24 = tpu.concatenate %17, %18 in 1 : vector<8x32xf32>, vector<8x32xf32> -> vector<8x64xf32>
    %25 = arith.truncf %24 : vector<8x64xf32> to vector<8x64xbf16>
    %cst_16 = arith.constant dense<0.000000e+00> : vector<8x256xf32>
    %26 = tpu.matmul %25, %16, %cst_16 {dimension_numbers = #tpu.dot_dimension_numbers<[1], [0], [0], [1], [0, 0, 1, 1], [], []>} : vector<8x64xbf16>, vector<64x256xbf16>, vector<8x256xf32> -> vector<8x256xf32>
    %27 = arith.addf %23, %26 : vector<8x256xf32>
    %28 = arith.negf %27 : vector<8x256xf32>
    %29 = math.exp %28 : vector<8x256xf32>
    %cst_17 = arith.constant 1.000000e+00 : f32
    %30 = vector.broadcast %cst_17 : f32 to vector<8x256xf32>
    %31 = arith.addf %30, %29 : vector<8x256xf32>
    %32 = arith.divf %30, %31 : vector<8x256xf32>
    %33 = math.tanh %27 : vector<8x256xf32>
    %34 = vector.extract_strided_slice %32 {offsets = [0, 0], sizes = [8, 32], strides = [1, 1]} : vector<8x256xf32> to vector<8x32xf32>
    %35 = vector.extract_strided_slice %32 {offsets = [0, 32], sizes = [8, 32], strides = [1, 1]} : vector<8x256xf32> to vector<8x32xf32>
    %36 = vector.extract_strided_slice %33 {offsets = [0, 64], sizes = [8, 32], strides = [1, 1]} : vector<8x256xf32> to vector<8x32xf32>
    %37 = vector.extract_strided_slice %32 {offsets = [0, 96], sizes = [8, 32], strides = [1, 1]} : vector<8x256xf32> to vector<8x32xf32>
    %38 = vector.extract_strided_slice %32 {offsets = [0, 128], sizes = [8, 32], strides = [1, 1]} : vector<8x256xf32> to vector<8x32xf32>
    %39 = vector.extract_strided_slice %32 {offsets = [0, 160], sizes = [8, 32], strides = [1, 1]} : vector<8x256xf32> to vector<8x32xf32>
    %40 = vector.extract_strided_slice %33 {offsets = [0, 192], sizes = [8, 32], strides = [1, 1]} : vector<8x256xf32> to vector<8x32xf32>
    %41 = vector.extract_strided_slice %32 {offsets = [0, 224], sizes = [8, 32], strides = [1, 1]} : vector<8x256xf32> to vector<8x32xf32>
    %42 = arith.mulf %35, %19 : vector<8x32xf32>
    %43 = arith.mulf %34, %36 : vector<8x32xf32>
    %44 = arith.addf %42, %43 : vector<8x32xf32>
    %45 = arith.mulf %39, %20 : vector<8x32xf32>
    %46 = arith.mulf %38, %40 : vector<8x32xf32>
    %47 = arith.addf %45, %46 : vector<8x32xf32>
    %48 = math.tanh %44 : vector<8x32xf32>
    %49 = arith.mulf %37, %48 : vector<8x32xf32>
    %50 = math.tanh %47 : vector<8x32xf32>
    %51 = arith.mulf %41, %50 : vector<8x32xf32>
    %52 = vector.extract_strided_slice %15 {offsets = [8, 0], sizes = [8, 128], strides = [1, 1]} : vector<64x256xf32> to vector<8x128xf32>
    %53 = vector.extract_strided_slice %15 {offsets = [48, 128], sizes = [8, 128], strides = [1, 1]} : vector<64x256xf32> to vector<8x128xf32>
    %54 = tpu.concatenate %52, %53 in 1 : vector<8x128xf32>, vector<8x128xf32> -> vector<8x256xf32>
    %55 = tpu.concatenate %49, %51 in 1 : vector<8x32xf32>, vector<8x32xf32> -> vector<8x64xf32>
    %56 = arith.truncf %55 : vector<8x64xf32> to vector<8x64xbf16>
    %cst_18 = arith.constant dense<0.000000e+00> : vector<8x256xf32>
    %57 = tpu.matmul %56, %16, %cst_18 {dimension_numbers = #tpu.dot_dimension_numbers<[1], [0], [0], [1], [0, 0, 1, 1], [], []>} : vector<8x64xbf16>, vector<64x256xbf16>, vector<8x256xf32> -> vector<8x256xf32>
    %58 = arith.addf %54, %57 : vector<8x256xf32>
    %59 = arith.negf %58 : vector<8x256xf32>
    %60 = math.exp %59 : vector<8x256xf32>
    %cst_19 = arith.constant 1.000000e+00 : f32
    %61 = vector.broadcast %cst_19 : f32 to vector<8x256xf32>
    %62 = arith.addf %61, %60 : vector<8x256xf32>
    %63 = arith.divf %61, %62 : vector<8x256xf32>
    %64 = math.tanh %58 : vector<8x256xf32>
    %65 = vector.extract_strided_slice %63 {offsets = [0, 0], sizes = [8, 32], strides = [1, 1]} : vector<8x256xf32> to vector<8x32xf32>
    %66 = vector.extract_strided_slice %63 {offsets = [0, 32], sizes = [8, 32], strides = [1, 1]} : vector<8x256xf32> to vector<8x32xf32>
    %67 = vector.extract_strided_slice %64 {offsets = [0, 64], sizes = [8, 32], strides = [1, 1]} : vector<8x256xf32> to vector<8x32xf32>
    %68 = vector.extract_strided_slice %63 {offsets = [0, 96], sizes = [8, 32], strides = [1, 1]} : vector<8x256xf32> to vector<8x32xf32>
    %69 = vector.extract_strided_slice %63 {offsets = [0, 128], sizes = [8, 32], strides = [1, 1]} : vector<8x256xf32> to vector<8x32xf32>
    %70 = vector.extract_strided_slice %63 {offsets = [0, 160], sizes = [8, 32], strides = [1, 1]} : vector<8x256xf32> to vector<8x32xf32>
    %71 = vector.extract_strided_slice %64 {offsets = [0, 192], sizes = [8, 32], strides = [1, 1]} : vector<8x256xf32> to vector<8x32xf32>
    %72 = vector.extract_strided_slice %63 {offsets = [0, 224], sizes = [8, 32], strides = [1, 1]} : vector<8x256xf32> to vector<8x32xf32>
    %73 = arith.mulf %66, %44 : vector<8x32xf32>
    %74 = arith.mulf %65, %67 : vector<8x32xf32>
    %75 = arith.addf %73, %74 : vector<8x32xf32>
    %76 = arith.mulf %70, %47 : vector<8x32xf32>
    %77 = arith.mulf %69, %71 : vector<8x32xf32>
    %78 = arith.addf %76, %77 : vector<8x32xf32>
    %79 = math.tanh %75 : vector<8x32xf32>
    %80 = arith.mulf %68, %79 : vector<8x32xf32>
    %81 = math.tanh %78 : vector<8x32xf32>
    %82 = arith.mulf %72, %81 : vector<8x32xf32>
    %83 = vector.extract_strided_slice %15 {offsets = [16, 0], sizes = [8, 128], strides = [1, 1]} : vector<64x256xf32> to vector<8x128xf32>
    %84 = vector.extract_strided_slice %15 {offsets = [40, 128], sizes = [8, 128], strides = [1, 1]} : vector<64x256xf32> to vector<8x128xf32>
    %85 = tpu.concatenate %83, %84 in 1 : vector<8x128xf32>, vector<8x128xf32> -> vector<8x256xf32>
    %86 = tpu.concatenate %80, %82 in 1 : vector<8x32xf32>, vector<8x32xf32> -> vector<8x64xf32>
    %87 = arith.truncf %86 : vector<8x64xf32> to vector<8x64xbf16>
    %cst_20 = arith.constant dense<0.000000e+00> : vector<8x256xf32>
    %88 = tpu.matmul %87, %16, %cst_20 {dimension_numbers = #tpu.dot_dimension_numbers<[1], [0], [0], [1], [0, 0, 1, 1], [], []>} : vector<8x64xbf16>, vector<64x256xbf16>, vector<8x256xf32> -> vector<8x256xf32>
    %89 = arith.addf %85, %88 : vector<8x256xf32>
    %90 = arith.negf %89 : vector<8x256xf32>
    %91 = math.exp %90 : vector<8x256xf32>
    %cst_21 = arith.constant 1.000000e+00 : f32
    %92 = vector.broadcast %cst_21 : f32 to vector<8x256xf32>
    %93 = arith.addf %92, %91 : vector<8x256xf32>
    %94 = arith.divf %92, %93 : vector<8x256xf32>
    %95 = math.tanh %89 : vector<8x256xf32>
    %96 = vector.extract_strided_slice %94 {offsets = [0, 0], sizes = [8, 32], strides = [1, 1]} : vector<8x256xf32> to vector<8x32xf32>
    %97 = vector.extract_strided_slice %94 {offsets = [0, 32], sizes = [8, 32], strides = [1, 1]} : vector<8x256xf32> to vector<8x32xf32>
    %98 = vector.extract_strided_slice %95 {offsets = [0, 64], sizes = [8, 32], strides = [1, 1]} : vector<8x256xf32> to vector<8x32xf32>
    %99 = vector.extract_strided_slice %94 {offsets = [0, 96], sizes = [8, 32], strides = [1, 1]} : vector<8x256xf32> to vector<8x32xf32>
    %100 = vector.extract_strided_slice %94 {offsets = [0, 128], sizes = [8, 32], strides = [1, 1]} : vector<8x256xf32> to vector<8x32xf32>
    %101 = vector.extract_strided_slice %94 {offsets = [0, 160], sizes = [8, 32], strides = [1, 1]} : vector<8x256xf32> to vector<8x32xf32>
    %102 = vector.extract_strided_slice %95 {offsets = [0, 192], sizes = [8, 32], strides = [1, 1]} : vector<8x256xf32> to vector<8x32xf32>
    %103 = vector.extract_strided_slice %94 {offsets = [0, 224], sizes = [8, 32], strides = [1, 1]} : vector<8x256xf32> to vector<8x32xf32>
    %104 = arith.mulf %97, %75 : vector<8x32xf32>
    %105 = arith.mulf %96, %98 : vector<8x32xf32>
    %106 = arith.addf %104, %105 : vector<8x32xf32>
    %107 = arith.mulf %101, %78 : vector<8x32xf32>
    %108 = arith.mulf %100, %102 : vector<8x32xf32>
    %109 = arith.addf %107, %108 : vector<8x32xf32>
    %110 = math.tanh %106 : vector<8x32xf32>
    %111 = arith.mulf %99, %110 : vector<8x32xf32>
    %112 = math.tanh %109 : vector<8x32xf32>
    %113 = arith.mulf %103, %112 : vector<8x32xf32>
    %114 = vector.extract_strided_slice %15 {offsets = [24, 0], sizes = [8, 128], strides = [1, 1]} : vector<64x256xf32> to vector<8x128xf32>
    %115 = vector.extract_strided_slice %15 {offsets = [32, 128], sizes = [8, 128], strides = [1, 1]} : vector<64x256xf32> to vector<8x128xf32>
    %116 = tpu.concatenate %114, %115 in 1 : vector<8x128xf32>, vector<8x128xf32> -> vector<8x256xf32>
    %117 = tpu.concatenate %111, %113 in 1 : vector<8x32xf32>, vector<8x32xf32> -> vector<8x64xf32>
    %118 = arith.truncf %117 : vector<8x64xf32> to vector<8x64xbf16>
    %cst_22 = arith.constant dense<0.000000e+00> : vector<8x256xf32>
    %119 = tpu.matmul %118, %16, %cst_22 {dimension_numbers = #tpu.dot_dimension_numbers<[1], [0], [0], [1], [0, 0, 1, 1], [], []>} : vector<8x64xbf16>, vector<64x256xbf16>, vector<8x256xf32> -> vector<8x256xf32>
    %120 = arith.addf %116, %119 : vector<8x256xf32>
    %121 = arith.negf %120 : vector<8x256xf32>
    %122 = math.exp %121 : vector<8x256xf32>
    %cst_23 = arith.constant 1.000000e+00 : f32
    %123 = vector.broadcast %cst_23 : f32 to vector<8x256xf32>
    %124 = arith.addf %123, %122 : vector<8x256xf32>
    %125 = arith.divf %123, %124 : vector<8x256xf32>
    %126 = math.tanh %120 : vector<8x256xf32>
    %127 = vector.extract_strided_slice %125 {offsets = [0, 0], sizes = [8, 32], strides = [1, 1]} : vector<8x256xf32> to vector<8x32xf32>
    %128 = vector.extract_strided_slice %125 {offsets = [0, 32], sizes = [8, 32], strides = [1, 1]} : vector<8x256xf32> to vector<8x32xf32>
    %129 = vector.extract_strided_slice %126 {offsets = [0, 64], sizes = [8, 32], strides = [1, 1]} : vector<8x256xf32> to vector<8x32xf32>
    %130 = vector.extract_strided_slice %125 {offsets = [0, 96], sizes = [8, 32], strides = [1, 1]} : vector<8x256xf32> to vector<8x32xf32>
    %131 = vector.extract_strided_slice %125 {offsets = [0, 128], sizes = [8, 32], strides = [1, 1]} : vector<8x256xf32> to vector<8x32xf32>
    %132 = vector.extract_strided_slice %125 {offsets = [0, 160], sizes = [8, 32], strides = [1, 1]} : vector<8x256xf32> to vector<8x32xf32>
    %133 = vector.extract_strided_slice %126 {offsets = [0, 192], sizes = [8, 32], strides = [1, 1]} : vector<8x256xf32> to vector<8x32xf32>
    %134 = vector.extract_strided_slice %125 {offsets = [0, 224], sizes = [8, 32], strides = [1, 1]} : vector<8x256xf32> to vector<8x32xf32>
    %135 = arith.mulf %128, %106 : vector<8x32xf32>
    %136 = arith.mulf %127, %129 : vector<8x32xf32>
    %137 = arith.addf %135, %136 : vector<8x32xf32>
    %138 = arith.mulf %132, %109 : vector<8x32xf32>
    %139 = arith.mulf %131, %133 : vector<8x32xf32>
    %140 = arith.addf %138, %139 : vector<8x32xf32>
    %141 = math.tanh %137 : vector<8x32xf32>
    %142 = arith.mulf %130, %141 : vector<8x32xf32>
    %143 = math.tanh %140 : vector<8x32xf32>
    %144 = arith.mulf %134, %143 : vector<8x32xf32>
    %145 = vector.extract_strided_slice %15 {offsets = [32, 0], sizes = [8, 128], strides = [1, 1]} : vector<64x256xf32> to vector<8x128xf32>
    %146 = vector.extract_strided_slice %15 {offsets = [24, 128], sizes = [8, 128], strides = [1, 1]} : vector<64x256xf32> to vector<8x128xf32>
    %147 = tpu.concatenate %145, %146 in 1 : vector<8x128xf32>, vector<8x128xf32> -> vector<8x256xf32>
    %148 = tpu.concatenate %142, %144 in 1 : vector<8x32xf32>, vector<8x32xf32> -> vector<8x64xf32>
    %149 = arith.truncf %148 : vector<8x64xf32> to vector<8x64xbf16>
    %cst_24 = arith.constant dense<0.000000e+00> : vector<8x256xf32>
    %150 = tpu.matmul %149, %16, %cst_24 {dimension_numbers = #tpu.dot_dimension_numbers<[1], [0], [0], [1], [0, 0, 1, 1], [], []>} : vector<8x64xbf16>, vector<64x256xbf16>, vector<8x256xf32> -> vector<8x256xf32>
    %151 = arith.addf %147, %150 : vector<8x256xf32>
    %152 = arith.negf %151 : vector<8x256xf32>
    %153 = math.exp %152 : vector<8x256xf32>
    %cst_25 = arith.constant 1.000000e+00 : f32
    %154 = vector.broadcast %cst_25 : f32 to vector<8x256xf32>
    %155 = arith.addf %154, %153 : vector<8x256xf32>
    %156 = arith.divf %154, %155 : vector<8x256xf32>
    %157 = math.tanh %151 : vector<8x256xf32>
    %158 = vector.extract_strided_slice %156 {offsets = [0, 0], sizes = [8, 32], strides = [1, 1]} : vector<8x256xf32> to vector<8x32xf32>
    %159 = vector.extract_strided_slice %156 {offsets = [0, 32], sizes = [8, 32], strides = [1, 1]} : vector<8x256xf32> to vector<8x32xf32>
    %160 = vector.extract_strided_slice %157 {offsets = [0, 64], sizes = [8, 32], strides = [1, 1]} : vector<8x256xf32> to vector<8x32xf32>
    %161 = vector.extract_strided_slice %156 {offsets = [0, 96], sizes = [8, 32], strides = [1, 1]} : vector<8x256xf32> to vector<8x32xf32>
    %162 = vector.extract_strided_slice %156 {offsets = [0, 128], sizes = [8, 32], strides = [1, 1]} : vector<8x256xf32> to vector<8x32xf32>
    %163 = vector.extract_strided_slice %156 {offsets = [0, 160], sizes = [8, 32], strides = [1, 1]} : vector<8x256xf32> to vector<8x32xf32>
    %164 = vector.extract_strided_slice %157 {offsets = [0, 192], sizes = [8, 32], strides = [1, 1]} : vector<8x256xf32> to vector<8x32xf32>
    %165 = vector.extract_strided_slice %156 {offsets = [0, 224], sizes = [8, 32], strides = [1, 1]} : vector<8x256xf32> to vector<8x32xf32>
    %166 = arith.mulf %159, %137 : vector<8x32xf32>
    %167 = arith.mulf %158, %160 : vector<8x32xf32>
    %168 = arith.addf %166, %167 : vector<8x32xf32>
    %169 = arith.mulf %163, %140 : vector<8x32xf32>
    %170 = arith.mulf %162, %164 : vector<8x32xf32>
    %171 = arith.addf %169, %170 : vector<8x32xf32>
    %172 = math.tanh %168 : vector<8x32xf32>
    %173 = arith.mulf %161, %172 : vector<8x32xf32>
    %174 = math.tanh %171 : vector<8x32xf32>
    %175 = arith.mulf %165, %174 : vector<8x32xf32>
    %176 = vector.extract_strided_slice %15 {offsets = [40, 0], sizes = [8, 128], strides = [1, 1]} : vector<64x256xf32> to vector<8x128xf32>
    %177 = vector.extract_strided_slice %15 {offsets = [16, 128], sizes = [8, 128], strides = [1, 1]} : vector<64x256xf32> to vector<8x128xf32>
    %178 = tpu.concatenate %176, %177 in 1 : vector<8x128xf32>, vector<8x128xf32> -> vector<8x256xf32>
    %179 = tpu.concatenate %173, %175 in 1 : vector<8x32xf32>, vector<8x32xf32> -> vector<8x64xf32>
    %180 = arith.truncf %179 : vector<8x64xf32> to vector<8x64xbf16>
    %cst_26 = arith.constant dense<0.000000e+00> : vector<8x256xf32>
    %181 = tpu.matmul %180, %16, %cst_26 {dimension_numbers = #tpu.dot_dimension_numbers<[1], [0], [0], [1], [0, 0, 1, 1], [], []>} : vector<8x64xbf16>, vector<64x256xbf16>, vector<8x256xf32> -> vector<8x256xf32>
    %182 = arith.addf %178, %181 : vector<8x256xf32>
    %183 = arith.negf %182 : vector<8x256xf32>
    %184 = math.exp %183 : vector<8x256xf32>
    %cst_27 = arith.constant 1.000000e+00 : f32
    %185 = vector.broadcast %cst_27 : f32 to vector<8x256xf32>
    %186 = arith.addf %185, %184 : vector<8x256xf32>
    %187 = arith.divf %185, %186 : vector<8x256xf32>
    %188 = math.tanh %182 : vector<8x256xf32>
    %189 = vector.extract_strided_slice %187 {offsets = [0, 0], sizes = [8, 32], strides = [1, 1]} : vector<8x256xf32> to vector<8x32xf32>
    %190 = vector.extract_strided_slice %187 {offsets = [0, 32], sizes = [8, 32], strides = [1, 1]} : vector<8x256xf32> to vector<8x32xf32>
    %191 = vector.extract_strided_slice %188 {offsets = [0, 64], sizes = [8, 32], strides = [1, 1]} : vector<8x256xf32> to vector<8x32xf32>
    %192 = vector.extract_strided_slice %187 {offsets = [0, 96], sizes = [8, 32], strides = [1, 1]} : vector<8x256xf32> to vector<8x32xf32>
    %193 = vector.extract_strided_slice %187 {offsets = [0, 128], sizes = [8, 32], strides = [1, 1]} : vector<8x256xf32> to vector<8x32xf32>
    %194 = vector.extract_strided_slice %187 {offsets = [0, 160], sizes = [8, 32], strides = [1, 1]} : vector<8x256xf32> to vector<8x32xf32>
    %195 = vector.extract_strided_slice %188 {offsets = [0, 192], sizes = [8, 32], strides = [1, 1]} : vector<8x256xf32> to vector<8x32xf32>
    %196 = vector.extract_strided_slice %187 {offsets = [0, 224], sizes = [8, 32], strides = [1, 1]} : vector<8x256xf32> to vector<8x32xf32>
    %197 = arith.mulf %190, %168 : vector<8x32xf32>
    %198 = arith.mulf %189, %191 : vector<8x32xf32>
    %199 = arith.addf %197, %198 : vector<8x32xf32>
    %200 = arith.mulf %194, %171 : vector<8x32xf32>
    %201 = arith.mulf %193, %195 : vector<8x32xf32>
    %202 = arith.addf %200, %201 : vector<8x32xf32>
    %203 = math.tanh %199 : vector<8x32xf32>
    %204 = arith.mulf %192, %203 : vector<8x32xf32>
    %205 = math.tanh %202 : vector<8x32xf32>
    %206 = arith.mulf %196, %205 : vector<8x32xf32>
    %207 = vector.extract_strided_slice %15 {offsets = [48, 0], sizes = [8, 128], strides = [1, 1]} : vector<64x256xf32> to vector<8x128xf32>
    %208 = vector.extract_strided_slice %15 {offsets = [8, 128], sizes = [8, 128], strides = [1, 1]} : vector<64x256xf32> to vector<8x128xf32>
    %209 = tpu.concatenate %207, %208 in 1 : vector<8x128xf32>, vector<8x128xf32> -> vector<8x256xf32>
    %210 = tpu.concatenate %204, %206 in 1 : vector<8x32xf32>, vector<8x32xf32> -> vector<8x64xf32>
    %211 = arith.truncf %210 : vector<8x64xf32> to vector<8x64xbf16>
    %cst_28 = arith.constant dense<0.000000e+00> : vector<8x256xf32>
    %212 = tpu.matmul %211, %16, %cst_28 {dimension_numbers = #tpu.dot_dimension_numbers<[1], [0], [0], [1], [0, 0, 1, 1], [], []>} : vector<8x64xbf16>, vector<64x256xbf16>, vector<8x256xf32> -> vector<8x256xf32>
    %213 = arith.addf %209, %212 : vector<8x256xf32>
    %214 = arith.negf %213 : vector<8x256xf32>
    %215 = math.exp %214 : vector<8x256xf32>
    %cst_29 = arith.constant 1.000000e+00 : f32
    %216 = vector.broadcast %cst_29 : f32 to vector<8x256xf32>
    %217 = arith.addf %216, %215 : vector<8x256xf32>
    %218 = arith.divf %216, %217 : vector<8x256xf32>
    %219 = math.tanh %213 : vector<8x256xf32>
    %220 = vector.extract_strided_slice %218 {offsets = [0, 0], sizes = [8, 32], strides = [1, 1]} : vector<8x256xf32> to vector<8x32xf32>
    %221 = vector.extract_strided_slice %218 {offsets = [0, 32], sizes = [8, 32], strides = [1, 1]} : vector<8x256xf32> to vector<8x32xf32>
    %222 = vector.extract_strided_slice %219 {offsets = [0, 64], sizes = [8, 32], strides = [1, 1]} : vector<8x256xf32> to vector<8x32xf32>
    %223 = vector.extract_strided_slice %218 {offsets = [0, 96], sizes = [8, 32], strides = [1, 1]} : vector<8x256xf32> to vector<8x32xf32>
    %224 = vector.extract_strided_slice %218 {offsets = [0, 128], sizes = [8, 32], strides = [1, 1]} : vector<8x256xf32> to vector<8x32xf32>
    %225 = vector.extract_strided_slice %218 {offsets = [0, 160], sizes = [8, 32], strides = [1, 1]} : vector<8x256xf32> to vector<8x32xf32>
    %226 = vector.extract_strided_slice %219 {offsets = [0, 192], sizes = [8, 32], strides = [1, 1]} : vector<8x256xf32> to vector<8x32xf32>
    %227 = vector.extract_strided_slice %218 {offsets = [0, 224], sizes = [8, 32], strides = [1, 1]} : vector<8x256xf32> to vector<8x32xf32>
    %228 = arith.mulf %221, %199 : vector<8x32xf32>
    %229 = arith.mulf %220, %222 : vector<8x32xf32>
    %230 = arith.addf %228, %229 : vector<8x32xf32>
    %231 = arith.mulf %225, %202 : vector<8x32xf32>
    %232 = arith.mulf %224, %226 : vector<8x32xf32>
    %233 = arith.addf %231, %232 : vector<8x32xf32>
    %234 = math.tanh %230 : vector<8x32xf32>
    %235 = arith.mulf %223, %234 : vector<8x32xf32>
    %236 = math.tanh %233 : vector<8x32xf32>
    %237 = arith.mulf %227, %236 : vector<8x32xf32>
    %238 = vector.extract_strided_slice %15 {offsets = [56, 0], sizes = [8, 128], strides = [1, 1]} : vector<64x256xf32> to vector<8x128xf32>
    %239 = vector.extract_strided_slice %15 {offsets = [0, 128], sizes = [8, 128], strides = [1, 1]} : vector<64x256xf32> to vector<8x128xf32>
    %240 = tpu.concatenate %238, %239 in 1 : vector<8x128xf32>, vector<8x128xf32> -> vector<8x256xf32>
    %241 = tpu.concatenate %235, %237 in 1 : vector<8x32xf32>, vector<8x32xf32> -> vector<8x64xf32>
    %242 = arith.truncf %241 : vector<8x64xf32> to vector<8x64xbf16>
    %cst_30 = arith.constant dense<0.000000e+00> : vector<8x256xf32>
    %243 = tpu.matmul %242, %16, %cst_30 {dimension_numbers = #tpu.dot_dimension_numbers<[1], [0], [0], [1], [0, 0, 1, 1], [], []>} : vector<8x64xbf16>, vector<64x256xbf16>, vector<8x256xf32> -> vector<8x256xf32>
    %244 = arith.addf %240, %243 : vector<8x256xf32>
    %245 = arith.negf %244 : vector<8x256xf32>
    %246 = math.exp %245 : vector<8x256xf32>
    %cst_31 = arith.constant 1.000000e+00 : f32
    %247 = vector.broadcast %cst_31 : f32 to vector<8x256xf32>
    %248 = arith.addf %247, %246 : vector<8x256xf32>
    %249 = arith.divf %247, %248 : vector<8x256xf32>
    %250 = math.tanh %244 : vector<8x256xf32>
    %251 = vector.extract_strided_slice %249 {offsets = [0, 0], sizes = [8, 32], strides = [1, 1]} : vector<8x256xf32> to vector<8x32xf32>
    %252 = vector.extract_strided_slice %249 {offsets = [0, 32], sizes = [8, 32], strides = [1, 1]} : vector<8x256xf32> to vector<8x32xf32>
    %253 = vector.extract_strided_slice %250 {offsets = [0, 64], sizes = [8, 32], strides = [1, 1]} : vector<8x256xf32> to vector<8x32xf32>
    %254 = vector.extract_strided_slice %249 {offsets = [0, 96], sizes = [8, 32], strides = [1, 1]} : vector<8x256xf32> to vector<8x32xf32>
    %255 = vector.extract_strided_slice %249 {offsets = [0, 128], sizes = [8, 32], strides = [1, 1]} : vector<8x256xf32> to vector<8x32xf32>
    %256 = vector.extract_strided_slice %249 {offsets = [0, 160], sizes = [8, 32], strides = [1, 1]} : vector<8x256xf32> to vector<8x32xf32>
    %257 = vector.extract_strided_slice %250 {offsets = [0, 192], sizes = [8, 32], strides = [1, 1]} : vector<8x256xf32> to vector<8x32xf32>
    %258 = vector.extract_strided_slice %249 {offsets = [0, 224], sizes = [8, 32], strides = [1, 1]} : vector<8x256xf32> to vector<8x32xf32>
    %259 = arith.mulf %252, %230 : vector<8x32xf32>
    %260 = arith.mulf %251, %253 : vector<8x32xf32>
    %261 = arith.addf %259, %260 : vector<8x32xf32>
    %262 = arith.mulf %256, %233 : vector<8x32xf32>
    %263 = arith.mulf %255, %257 : vector<8x32xf32>
    %264 = arith.addf %262, %263 : vector<8x32xf32>
    %265 = math.tanh %261 : vector<8x32xf32>
    %266 = arith.mulf %254, %265 : vector<8x32xf32>
    %267 = math.tanh %264 : vector<8x32xf32>
    %268 = arith.mulf %258, %267 : vector<8x32xf32>
    %269 = tpu.concatenate %266, %268 in 1 : vector<8x32xf32>, vector<8x32xf32> -> vector<8x64xf32>
    %c0_32 = arith.constant 0 : index
    %c0_33 = arith.constant 0 : index
    %270 = vector.load %arg5[%c0_32, %c0_33] : memref<64x128xf32, #tpu.memory_space<vmem>>, vector<64x128xf32>
    %cst_34 = arith.constant dense<0.000000e+00> : vector<8x128xf32>
    %271 = tpu.matmul %269, %270, %cst_34 {dimension_numbers = #tpu.dot_dimension_numbers<[1], [0], [0], [1], [0, 0, 1, 1], [], []>} : vector<8x64xf32>, vector<64x128xf32>, vector<8x128xf32> -> vector<8x128xf32>
    %c0_35 = arith.constant 0 : index
    %c0_36 = arith.constant 0 : index
    %272 = vector.load %arg6[%c0_35, %c0_36] : memref<1x128xf32, #tpu.memory_space<vmem>>, vector<1x128xf32>
    %273 = vector.broadcast %272 : vector<1x128xf32> to vector<8x128xf32>
    %274 = arith.addf %271, %273 : vector<8x128xf32>
    %275 = arith.negf %274 : vector<8x128xf32>
    %276 = math.exp %275 : vector<8x128xf32>
    %cst_37 = arith.constant 1.000000e+00 : f32
    %277 = vector.broadcast %cst_37 : f32 to vector<8x128xf32>
    %278 = arith.addf %277, %276 : vector<8x128xf32>
    %279 = arith.divf %277, %278 : vector<8x128xf32>
    %c0_38 = arith.constant 0 : index
    %c0_39 = arith.constant 0 : index
    %280 = vector.load %arg7[%c0_38, %c0_39] : memref<8x128xf32, #tpu.memory_space<vmem>>, vector<8x128xf32>
    tpu.vector_store %arg7[%c0_38, %c0_39], %279 {strides = array<i32>} : memref<8x128xf32, #tpu.memory_space<vmem>>, vector<8x128xf32>,
    return
  }
}

</mosaic_0001>

<llo_original>
// kernel: brnn_forward.1
$region0: #{brnn_forward.1}
  #allocation0 [shape = 'u32[]', space=smem, size = 0x4, offset = 0x4, fixed_abs, tag = 'smem constant byte address 0x4 - core index']
  #allocation1 [shape = 'u32[144,128]{1,0:T(1,128)}', space=vmem, size = 0x12000, scoped, tag = 'internal scratch']
  %s0 = inlined_call_operand.vmem [shape: s32[64,1], index: 0, kind: input, shape index: {}]
  %s1 = inlined_call_operand.vmem [shape: bf16[64,32], index: 1, kind: input, shape index: {}]
  %s2 = inlined_call_operand.vmem [shape: bf16[32,256], index: 2, kind: input, shape index: {}]
  %s3 = inlined_call_operand.vmem [shape: bf16[64,256], index: 3, kind: input, shape index: {}]
  %s4 = inlined_call_operand.vmem [shape: f32[1,256], index: 4, kind: input, shape index: {}]
  %s5 = inlined_call_operand.vmem [shape: f32[64,128], index: 5, kind: input, shape index: {}]
  %s6 = inlined_call_operand.vmem [shape: f32[1,128], index: 6, kind: input, shape index: {}]
  %s7 = inlined_call_operand.vmem [shape: f32[8,128], index: 7, kind: output, shape index: {}]
  %s8 = sld [smem:[#allocation0]]
  $region38: #{brnn_forward.1} parent=0
    _
  %s10 = ssub.s32 1, %s8
  %s11 = scalar_select 0, %s10, %s8
  // Predicated region
  $region2: #{brnn_forward.1} parent=0 // pred_check
    _
  $region3: #{brnn_forward.1} parent=0 // pred_check_branch
    %13 = sbr.rel (0) target = $region5
  $region4: #{brnn_forward.1} parent=0 // pred_region
    _
  $region5: #{brnn_forward.1} parent=0 // pred_fallthru
    _
  // Predicated region
  $region6: #{brnn_forward.1} parent=0 // pred_check
    _
  $region7: #{brnn_forward.1} parent=0 // pred_check_branch
    %15 = sbr.rel (0) target = $region9
  $region8: #{brnn_forward.1} parent=0 // pred_region
    _
  $region9: #{brnn_forward.1} parent=0 // pred_fallthru
    _
  // Predicated region
  $region10: #{brnn_forward.1} parent=0 // pred_check
    _
  $region11: #{brnn_forward.1} parent=0 // pred_check_branch
    %17 = sbr.rel (0) target = $region13
  $region12: #{brnn_forward.1} parent=0 // pred_region
    _
  $region13: #{brnn_forward.1} parent=0 // pred_fallthru
    _
  // Predicated region
  $region14: #{brnn_forward.1} parent=0 // pred_check
    _
  $region15: #{brnn_forward.1} parent=0 // pred_check_branch
    %19 = sbr.rel (0) target = $region17
  $region16: #{brnn_forward.1} parent=0 // pred_region
    _
  $region17: #{brnn_forward.1} parent=0 // pred_fallthru
    _
  // Predicated region
  $region18: #{brnn_forward.1} parent=0 // pred_check
    _
  $region19: #{brnn_forward.1} parent=0 // pred_check_branch
    %21 = sbr.rel (0) target = $region21
  $region20: #{brnn_forward.1} parent=0 // pred_region
    _
  $region21: #{brnn_forward.1} parent=0 // pred_fallthru
    _
  // Predicated region
  $region22: #{brnn_forward.1} parent=0 // pred_check
    _
  $region23: #{brnn_forward.1} parent=0 // pred_check_branch
    %23 = sbr.rel (0) target = $region25
  $region24: #{brnn_forward.1} parent=0 // pred_region
    _
  $region25: #{brnn_forward.1} parent=0 // pred_fallthru
    _
  // Predicated region
  $region26: #{brnn_forward.1} parent=0 // pred_check
    _
  $region27: #{brnn_forward.1} parent=0 // pred_check_branch
    %25 = sbr.rel (0) target = $region29
  $region28: #{brnn_forward.1} parent=0 // pred_region
    _
  $region29: #{brnn_forward.1} parent=0 // pred_fallthru
    _
  %v27 = vld [vmem:[%s0] sm:$0xff]
  %v28 = vld [vmem:[%s0 + $0x8] sm:$0xff]
  %v29 = vld [vmem:[%s0 + $0x10] sm:$0xff]
  %v30 = vld [vmem:[%s0 + $0x18] sm:$0xff]
  %v31 = vld [vmem:[%s0 + $0x20] sm:$0xff]
  %v32 = vld [vmem:[%s0 + $0x28] sm:$0xff]
  %v33 = vld [vmem:[%s0 + $0x30] sm:$0xff]
  %v34 = vld [vmem:[%s0 + $0x38] sm:$0xff]
  %v35 = vlaneseq
  %v36 = vand.u32 %v35, 127
  %37 = vset.pattern.permute.xlu0 0
  %38 = vperm.xlu0 %37, %v27
  %v39 = vpop.permute.xlu0 %38
  %40 = vset.pattern.permute.xlu0 0
  %41 = vperm.xlu0 %40, %v28
  %v42 = vpop.permute.xlu0 %41
  %43 = vset.pattern.permute.xlu0 0
  %44 = vperm.xlu0 %43, %v29
  %v45 = vpop.permute.xlu0 %44
  %46 = vset.pattern.permute.xlu0 0
  %47 = vperm.xlu0 %46, %v30
  %v48 = vpop.permute.xlu0 %47
  %49 = vset.pattern.permute.xlu0 0
  %50 = vperm.xlu0 %49, %v31
  %v51 = vpop.permute.xlu0 %50
  %52 = vset.pattern.permute.xlu0 0
  %53 = vperm.xlu0 %52, %v32
  %v54 = vpop.permute.xlu0 %53
  %55 = vset.pattern.permute.xlu0 0
  %56 = vperm.xlu0 %55, %v33
  %v57 = vpop.permute.xlu0 %56
  %58 = vset.pattern.permute.xlu0 0
  %59 = vperm.xlu0 %58, %v34
  %v60 = vpop.permute.xlu0 %59
  %vm61 = vcmp.eq.s32.totalorder %v36, %v39
  %vm62 = vcmp.eq.s32.totalorder %v36, %v42
  %vm63 = vcmp.eq.s32.totalorder %v36, %v45
  %vm64 = vcmp.eq.s32.totalorder %v36, %v48
  %vm65 = vcmp.eq.s32.totalorder %v36, %v51
  %vm66 = vcmp.eq.s32.totalorder %v36, %v54
  %vm67 = vcmp.eq.s32.totalorder %v36, %v57
  %vm68 = vcmp.eq.s32.totalorder %v36, %v60
  %v69 = vsel %vm61, 1.0, 0.0
  %v70 = vsel %vm62, 1.0, 0.0
  %v71 = vsel %vm63, 1.0, 0.0
  %v72 = vsel %vm64, 1.0, 0.0
  %v73 = vsel %vm65, 1.0, 0.0
  %v74 = vsel %vm66, 1.0, 0.0
  %v75 = vsel %vm67, 1.0, 0.0
  %v76 = vsel %vm68, 1.0, 0.0
  %v77 = vpack.c.bf16 %v70, %v69
  %v78 = vpack.c.bf16 %v72, %v71
  %v79 = vpack.c.bf16 %v74, %v73
  %v80 = vpack.c.bf16 %v76, %v75
  %v81 = vld [vmem:[%s1] sm:$0xf]
  %v82 = vld [vmem:[%s1 + $0x4] sm:$0xf]
  %v83 = vld [vmem:[%s1 + $0x8] sm:$0xf]
  %v84 = vld [vmem:[%s1 + $0xc] sm:$0xf]
  %v85 = vld [vmem:[%s1 + $0x10] sm:$0xf]
  %v86 = vld [vmem:[%s1 + $0x14] sm:$0xf]
  %v87 = vld [vmem:[%s1 + $0x18] sm:$0xf]
  %v88 = vld [vmem:[%s1 + $0x1c] sm:$0xf]
  %v97 = vunpack.c.l.b16 %v81
  %v98 = vunpack.c.l.b16 %v82
  %v99 = vunpack.c.l.b16 %v83
  %v100 = vunpack.c.l.b16 %v84
  %v101 = vunpack.c.l.b16 %v85
  %v102 = vunpack.c.l.b16 %v86
  %v103 = vunpack.c.l.b16 %v87
  %v104 = vunpack.c.l.b16 %v88
  %v105 = vpack.c.b16 %v98, %v97
  %v106 = vpack.c.b16 %v100, %v99
  %v107 = vpack.c.b16 %v102, %v101
  %v108 = vpack.c.b16 %v104, %v103
  %vm113 = vcmask 523264
  %v115 = vsel %vm113, %v77, 0
  %v118 = vsel %vm113, %v78, 0
  %v121 = vsel %vm113, %v79, 0
  %v124 = vsel %vm113, %v80, 0
  %126 = vmatprep.subr.bf16.mxu0 0
  %127 = vmatpush1.bf16.msra.mxu0 0
  %128 = vmatprep.subr.bf16.mxu0 0
  %129 = vmatpush1.bf16.msra.mxu0 0
  %130 = vmatprep.subr.bf16.mxu0 0
  %131 = vmatpush1.bf16.msra.mxu0 0
  %132 = vmatprep.subr.bf16.mxu0 0
  %133 = vmatpush1.bf16.msra.mxu0 0
  %134 = vmatprep.subr.bf16.mxu0 0
  %135 = vmatpush1.bf16.msra.mxu0 %v108
  %136 = vmatprep.subr.bf16.mxu0 0
  %137 = vmatpush1.bf16.msra.mxu0 %v107
  %138 = vmatprep.subr.bf16.mxu0 0
  %139 = vmatpush1.bf16.msra.mxu0 %v106
  %140 = vmatprep.subr.bf16.mxu0 0
  %141 = vmatpush1.bf16.msra.mxu0 %v105
  %142 = vmatprep.subr.bf16.mxu0 0
  %143 = vmatpush2.bf16.msra.mxu0 0
  %144 = vmatprep.subr.bf16.mxu0 0
  %145 = vmatpush2.bf16.msra.mxu0 0
  %146 = vmatprep.subr.bf16.mxu0 0
  %147 = vmatpush2.bf16.msra.mxu0 0
  %148 = vmatprep.subr.bf16.mxu0 0
  %149 = vmatpush2.bf16.msra.mxu0 0
  %150 = vmatprep.subr.bf16.mxu0 0
  %151 = vmatpush2.bf16.msra.mxu0 0
  %152 = vmatprep.subr.bf16.mxu0 0
  %153 = vmatpush2.bf16.msra.mxu0 0
  %154 = vmatprep.subr.bf16.mxu0 0
  %155 = vmatpush2.bf16.msra.mxu0 0
  %156 = vmatprep.subr.bf16.mxu0 0
  %157 = vmatpush2.bf16.msra.mxu0 0
  %158 = vmatprep.mubr.bf16.mxu0 0
  %159 = vmatmul.mubr.bf16.gmra.mxu0 %v115
  %v160 = vpop.f32.mrf.mxu0
  %v161 = vadd.f32 0.0, %v160
  %v162 = vpop.f32.mrf.mxu0
  %v163 = vpop.f32.mrf.mxu0
  %v164 = vadd.f32 0.0, %v163
  %v165 = vpop.f32.mrf.mxu0
  %166 = vmatprep.mubr.bf16.mxu0 0
  %167 = vmatmul.mubr.bf16.gmra.mxu0 %v118
  %v168 = vpop.f32.mrf.mxu0
  %v169 = vadd.f32 0.0, %v168
  %v170 = vpop.f32.mrf.mxu0
  %v171 = vpop.f32.mrf.mxu0
  %v172 = vadd.f32 0.0, %v171
  %v173 = vpop.f32.mrf.mxu0
  %174 = vmatprep.mubr.bf16.mxu0 0
  %175 = vmatmul.mubr.bf16.gmra.mxu0 %v121
  %v176 = vpop.f32.mrf.mxu0
  %v177 = vadd.f32 0.0, %v176
  %v178 = vpop.f32.mrf.mxu0
  %v179 = vpop.f32.mrf.mxu0
  %v180 = vadd.f32 0.0, %v179
  %v181 = vpop.f32.mrf.mxu0
  %182 = vmatprep.mubr.bf16.mxu0 0
  %183 = vmatmul.mubr.bf16.gmra.mxu0 %v124
  %v184 = vpop.f32.mrf.mxu0
  %v185 = vadd.f32 0.0, %v184
  %v186 = vpop.f32.mrf.mxu0
  %v187 = vpop.f32.mrf.mxu0
  %v188 = vadd.f32 0.0, %v187
  %v189 = vpop.f32.mrf.mxu0
  %190 = vdwg.mxu0
  %v191 = vpack.c.bf16 %v164, %v161
  %v192 = vpack.c.bf16 %v172, %v169
  %v193 = vpack.c.bf16 %v180, %v177
  %v194 = vpack.c.bf16 %v188, %v185
  %v195 = vld [vmem:[%s2] sm:$0xff]
  %v196 = vld [vmem:[%s2 + $0x8] sm:$0xff]
  %v197 = vld [vmem:[%s2 + $0x10] sm:$0xff]
  %v198 = vld [vmem:[%s2 + $0x18] sm:$0xff]
  %v199 = vld [vmem:[%s4] sm:$0x3]
  %v201 = vlaneseq
  %v202 = vshrl.u32 %v201, 7
  %v203 = vsub.s32 0, %v202
  %v204 = vrot.slane %v199, %v203
  %v205 = vlaneseq
  %v206 = vshrl.u32 %v205, 7
  %v207 = vsub.s32 1, %v206
  %v208 = vrot.slane %v199, %v207
  %v215 = vunpack.c.l.b16 %v195
  %v216 = vunpack.c.h.b16 %v195
  %v217 = vunpack.c.l.b16 %v196
  %v218 = vunpack.c.h.b16 %v196
  %v219 = vunpack.c.l.b16 %v197
  %v220 = vunpack.c.h.b16 %v197
  %v221 = vunpack.c.l.b16 %v198
  %v222 = vunpack.c.h.b16 %v198
  %v223 = vpack.c.b16 %v217, %v215
  %v224 = vpack.c.b16 %v218, %v216
  %v225 = vpack.c.b16 %v221, %v219
  %v226 = vpack.c.b16 %v222, %v220
  %vm231 = vcmask 261120
  %v233 = vsel %vm231, %v191, 0
  %v236 = vsel %vm231, %v192, 0
  %v239 = vsel %vm231, %v193, 0
  %v242 = vsel %vm231, %v194, 0
  %244 = vmatprep.subr.bf16.mxu0 0
  %245 = vmatpush1.bf16.msra.mxu0 0
  %246 = vmatprep.subr.bf16.mxu0 0
  %247 = vmatpush1.bf16.msra.mxu0 0
  %248 = vmatprep.subr.bf16.mxu0 0
  %249 = vmatpush1.bf16.msra.mxu0 0
  %250 = vmatprep.subr.bf16.mxu0 0
  %251 = vmatpush1.bf16.msra.mxu0 0
  %252 = vmatprep.subr.bf16.mxu0 0
  %253 = vmatpush1.bf16.msra.mxu0 0
  %254 = vmatprep.subr.bf16.mxu0 0
  %255 = vmatpush1.bf16.msra.mxu0 0
  %256 = vmatprep.subr.bf16.mxu0 %v226
  %257 = vmatpush1.bf16.msra.mxu0 %v225
  %258 = vmatprep.subr.bf16.mxu0 %v224
  %259 = vmatpush1.bf16.msra.mxu0 %v223
  %260 = vmatprep.subr.bf16.mxu0 0
  %261 = vmatpush2.bf16.msra.mxu0 0
  %262 = vmatprep.subr.bf16.mxu0 0
  %263 = vmatpush2.bf16.msra.mxu0 0
  %264 = vmatprep.subr.bf16.mxu0 0
  %265 = vmatpush2.bf16.msra.mxu0 0
  %266 = vmatprep.subr.bf16.mxu0 0
  %267 = vmatpush2.bf16.msra.mxu0 0
  %268 = vmatprep.subr.bf16.mxu0 0
  %269 = vmatpush2.bf16.msra.mxu0 0
  %270 = vmatprep.subr.bf16.mxu0 0
  %271 = vmatpush2.bf16.msra.mxu0 0
  %272 = vmatprep.subr.bf16.mxu0 0
  %273 = vmatpush2.bf16.msra.mxu0 0
  %274 = vmatprep.subr.bf16.mxu0 0
  %275 = vmatpush2.bf16.msra.mxu0 0
  %276 = vmatprep.mubr.bf16.mxu0 0
  %277 = vmatmul.mubr.bf16.gmra.mxu0 %v233
  %v278 = vpop.f32.mrf.mxu0
  %v279 = vadd.f32 %v204, %v278
  %v280 = vpop.f32.mrf.mxu0
  %v281 = vadd.f32 %v208, %v280
  %v282 = vpop.f32.mrf.mxu0
  %v283 = vadd.f32 %v204, %v282
  %v284 = vpop.f32.mrf.mxu0
  %v285 = vadd.f32 %v208, %v284
  %286 = vmatprep.mubr.bf16.mxu0 0
  %287 = vmatmul.mubr.bf16.gmra.mxu0 %v236
  %v288 = vpop.f32.mrf.mxu0
  %v289 = vadd.f32 %v204, %v288
  %v290 = vpop.f32.mrf.mxu0
  %v291 = vadd.f32 %v208, %v290
  %v292 = vpop.f32.mrf.mxu0
  %v293 = vadd.f32 %v204, %v292
  %v294 = vpop.f32.mrf.mxu0
  %v295 = vadd.f32 %v208, %v294
  %296 = vmatprep.mubr.bf16.mxu0 0
  %297 = vmatmul.mubr.bf16.gmra.mxu0 %v239
  %v298 = vpop.f32.mrf.mxu0
  %v299 = vadd.f32 %v204, %v298
  %v300 = vpop.f32.mrf.mxu0
  %v301 = vadd.f32 %v208, %v300
  %v302 = vpop.f32.mrf.mxu0
  %v303 = vadd.f32 %v204, %v302
  %v304 = vpop.f32.mrf.mxu0
  %v305 = vadd.f32 %v208, %v304
  %306 = vmatprep.mubr.bf16.mxu0 0
  %307 = vmatmul.mubr.bf16.gmra.mxu0 %v242
  %v308 = vpop.f32.mrf.mxu0
  %v309 = vadd.f32 %v204, %v308
  %v310 = vpop.f32.mrf.mxu0
  %v311 = vadd.f32 %v208, %v310
  %v312 = vpop.f32.mrf.mxu0
  %v313 = vadd.f32 %v204, %v312
  %v314 = vpop.f32.mrf.mxu0
  %v315 = vadd.f32 %v208, %v314
  %316 = vdwg.mxu0
  %v317 = vld [vmem:[%s3] sm:$0xff]
  %v318 = vld [vmem:[%s3 + $0x8] sm:$0xff]
  %v319 = vld [vmem:[%s3 + $0x10] sm:$0xff]
  %v320 = vld [vmem:[%s3 + $0x18] sm:$0xff]
  %v321 = vld [vmem:[%s3 + $0x20] sm:$0xff]
  %v322 = vld [vmem:[%s3 + $0x28] sm:$0xff]
  %v323 = vld [vmem:[%s3 + $0x30] sm:$0xff]
  %v324 = vld [vmem:[%s3 + $0x38] sm:$0xff]
  %v325 = vpack.c.bf16 0.0, 0.0
  %v334 = vunpack.c.l.b16 %v317
  %v335 = vunpack.c.h.b16 %v317
  %v336 = vunpack.c.l.b16 %v318
  %v337 = vunpack.c.h.b16 %v318
  %v338 = vunpack.c.l.b16 %v319
  %v339 = vunpack.c.h.b16 %v319
  %v340 = vunpack.c.l.b16 %v320
  %v341 = vunpack.c.h.b16 %v320
  %v342 = vunpack.c.l.b16 %v321
  %v343 = vunpack.c.h.b16 %v321
  %v344 = vunpack.c.l.b16 %v322
  %v345 = vunpack.c.h.b16 %v322
  %v346 = vunpack.c.l.b16 %v323
  %v347 = vunpack.c.h.b16 %v323
  %v348 = vunpack.c.l.b16 %v324
  %v349 = vunpack.c.h.b16 %v324
  %v350 = vpack.c.b16 %v336, %v334
  %v351 = vpack.c.b16 %v337, %v335
  %v352 = vpack.c.b16 %v340, %v338
  %v353 = vpack.c.b16 %v341, %v339
  %v354 = vpack.c.b16 %v344, %v342
  %v355 = vpack.c.b16 %v345, %v343
  %v356 = vpack.c.b16 %v348, %v346
  %v357 = vpack.c.b16 %v349, %v347
  %v367 = vsel %vm113, %v325, 0
  %369 = vmatprep.subr.bf16.mxu0 0
  %370 = vmatpush1.bf16.msra.mxu0 0
  %371 = vmatprep.subr.bf16.mxu0 0
  %372 = vmatpush1.bf16.msra.mxu0 0
  %373 = vmatprep.subr.bf16.mxu0 0
  %374 = vmatpush1.bf16.msra.mxu0 0
  %375 = vmatprep.subr.bf16.mxu0 0
  %376 = vmatpush1.bf16.msra.mxu0 0
  %377 = vmatprep.subr.bf16.mxu0 %v357
  %378 = vmatpush1.bf16.msra.mxu0 %v356
  %379 = vmatprep.subr.bf16.mxu0 %v355
  %380 = vmatpush1.bf16.msra.mxu0 %v354
  %381 = vmatprep.subr.bf16.mxu0 %v353
  %382 = vmatpush1.bf16.msra.mxu0 %v352
  %383 = vmatprep.subr.bf16.mxu0 %v351
  %384 = vmatpush1.bf16.msra.mxu0 %v350
  %385 = vmatprep.subr.bf16.mxu0 0
  %386 = vmatpush2.bf16.msra.mxu0 0
  %387 = vmatprep.subr.bf16.mxu0 0
  %388 = vmatpush2.bf16.msra.mxu0 0
  %389 = vmatprep.subr.bf16.mxu0 0
  %390 = vmatpush2.bf16.msra.mxu0 0
  %391 = vmatprep.subr.bf16.mxu0 0
  %392 = vmatpush2.bf16.msra.mxu0 0
  %393 = vmatprep.subr.bf16.mxu0 0
  %394 = vmatpush2.bf16.msra.mxu0 0
  %395 = vmatprep.subr.bf16.mxu0 0
  %396 = vmatpush2.bf16.msra.mxu0 0
  %397 = vmatprep.subr.bf16.mxu0 0
  %398 = vmatpush2.bf16.msra.mxu0 0
  %399 = vmatprep.subr.bf16.mxu0 0
  %400 = vmatpush2.bf16.msra.mxu0 0
  %401 = vmatprep.mubr.bf16.mxu0 0
  %402 = vmatmul.mubr.bf16.gmra.mxu0 %v367
  %v403 = vpop.f32.mrf.mxu0
  %v404 = vadd.f32 0.0, %v403
  %v405 = vpop.f32.mrf.mxu0
  %v406 = vadd.f32 0.0, %v405
  %v407 = vpop.f32.mrf.mxu0
  %v408 = vpop.f32.mrf.mxu0
  %409 = vdwg.mxu0
  %v410 = vadd.f32 %v279, %v404
  %v411 = vadd.f32 %v315, %v406
  %v412 = vxor.u32 %v410, 2147483648
  %v413 = vxor.u32 %v411, 2147483648
  %v414 = vmul.f32 %v412, 1.442695
  %v415 = vpow.pop %v414
  %v416 = vmul.f32 %v413, 1.442695
  %v417 = vpow.pop %v416
  %v418 = vadd.f32 %v415, 1.0
  %v419 = vadd.f32 %v417, 1.0
  %v420 = vrcp.pop %v418
  %v421 = vmul.f32 1.0, %v420
  %v422 = vrcp.pop %v419
  %v423 = vmul.f32 1.0, %v422
  %v424 = vtanh.pop %v410
  %v425 = vtanh.pop %v411
  %v426 = vmul.f32 %v421, 0.0
  %428 = vrot.lane.b32.xlu0 %v424, 64
  %v429 = vpop.permute.xlu0 %428
  %v431 = vmul.f32 %v421, %v429
  %433 = vrot.lane.b32.xlu0 %v431, 32
  %v434 = vpop.permute.xlu0 %433
  %v436 = vadd.f32 %v426, %v434
  %v437 = vmul.f32 %v423, 0.0
  %439 = vrot.lane.b32.xlu0 %v425, 64
  %v440 = vpop.permute.xlu0 %439
  %v442 = vmul.f32 %v423, %v440
  %444 = vrot.lane.b32.xlu0 %v442, 32
  %v445 = vpop.permute.xlu0 %444
  %v447 = vadd.f32 %v437, %v445
  %v448 = vtanh.pop %v436
  %450 = vrot.lane.b32.xlu0 %v448, 64
  %v451 = vpop.permute.xlu0 %450
  %v453 = vmul.f32 %v421, %v451
  %v454 = vtanh.pop %v447
  %456 = vrot.lane.b32.xlu0 %v454, 64
  %v457 = vpop.permute.xlu0 %456
  %v459 = vmul.f32 %v423, %v457
  %461 = vrot.lane.b32.xlu0 %v453, 32
  %v462 = vpop.permute.xlu0 %461
  %465 = vrot.lane.b32.xlu0 %v459, 64
  %v466 = vpop.permute.xlu0 %465
  %v468 = vsel %vm231, %v462, %v466
  %v469 = vpack.c.bf16 %v468, %v468
  %v471 = vsel %vm113, %v469, 0
  %473 = vmatprep.subr.bf16.mxu0 0
  %474 = vmatpush1.bf16.msra.mxu0 0
  %475 = vmatprep.subr.bf16.mxu0 0
  %476 = vmatpush1.bf16.msra.mxu0 0
  %477 = vmatprep.subr.bf16.mxu0 0
  %478 = vmatpush1.bf16.msra.mxu0 0
  %479 = vmatprep.subr.bf16.mxu0 0
  %480 = vmatpush1.bf16.msra.mxu0 0
  %481 = vmatprep.subr.bf16.mxu0 %v357
  %482 = vmatpush1.bf16.msra.mxu0 %v356
  %483 = vmatprep.subr.bf16.mxu0 %v355
  %484 = vmatpush1.bf16.msra.mxu0 %v354
  %485 = vmatprep.subr.bf16.mxu0 %v353
  %486 = vmatpush1.bf16.msra.mxu0 %v352
  %487 = vmatprep.subr.bf16.mxu0 %v351
  %488 = vmatpush1.bf16.msra.mxu0 %v350
  %489 = vmatprep.subr.bf16.mxu0 0
  %490 = vmatpush2.bf16.msra.mxu0 0
  %491 = vmatprep.subr.bf16.mxu0 0
  %492 = vmatpush2.bf16.msra.mxu0 0
  %493 = vmatprep.subr.bf16.mxu0 0
  %494 = vmatpush2.bf16.msra.mxu0 0
  %495 = vmatprep.subr.bf16.mxu0 0
  %496 = vmatpush2.bf16.msra.mxu0 0
  %497 = vmatprep.subr.bf16.mxu0 0
  %498 = vmatpush2.bf16.msra.mxu0 0
  %499 = vmatprep.subr.bf16.mxu0 0
  %500 = vmatpush2.bf16.msra.mxu0 0
  %501 = vmatprep.subr.bf16.mxu0 0
  %502 = vmatpush2.bf16.msra.mxu0 0
  %503 = vmatprep.subr.bf16.mxu0 0
  %504 = vmatpush2.bf16.msra.mxu0 0
  %505 = vmatprep.mubr.bf16.mxu0 0
  %506 = vmatmul.mubr.bf16.gmra.mxu0 %v471
  %v507 = vpop.f32.mrf.mxu0
  %v508 = vadd.f32 0.0, %v507
  %v509 = vpop.f32.mrf.mxu0
  %v510 = vadd.f32 0.0, %v509
  %v511 = vpop.f32.mrf.mxu0
  %v512 = vpop.f32.mrf.mxu0
  %513 = vdwg.mxu0
  %v514 = vadd.f32 %v283, %v508
  %v515 = vadd.f32 %v311, %v510
  %v516 = vxor.u32 %v514, 2147483648
  %v517 = vxor.u32 %v515, 2147483648
  %v518 = vmul.f32 %v516, 1.442695
  %v519 = vpow.pop %v518
  %v520 = vmul.f32 %v517, 1.442695
  %v521 = vpow.pop %v520
  %v522 = vadd.f32 %v519, 1.0
  %v523 = vadd.f32 %v521, 1.0
  %v524 = vrcp.pop %v522
  %v525 = vmul.f32 1.0, %v524
  %v526 = vrcp.pop %v523
  %v527 = vmul.f32 1.0, %v526
  %v528 = vtanh.pop %v514
  %v529 = vtanh.pop %v515
  %v530 = vmul.f32 %v525, %v436
  %532 = vrot.lane.b32.xlu0 %v528, 64
  %v533 = vpop.permute.xlu0 %532
  %v535 = vmul.f32 %v525, %v533
  %537 = vrot.lane.b32.xlu0 %v535, 32
  %v538 = vpop.permute.xlu0 %537
  %v540 = vadd.f32 %v530, %v538
  %v541 = vmul.f32 %v527, %v447
  %543 = vrot.lane.b32.xlu0 %v529, 64
  %v544 = vpop.permute.xlu0 %543
  %v546 = vmul.f32 %v527, %v544
  %548 = vrot.lane.b32.xlu0 %v546, 32
  %v549 = vpop.permute.xlu0 %548
  %v551 = vadd.f32 %v541, %v549
  %v552 = vtanh.pop %v540
  %554 = vrot.lane.b32.xlu0 %v552, 64
  %v555 = vpop.permute.xlu0 %554
  %v557 = vmul.f32 %v525, %v555
  %v558 = vtanh.pop %v551
  %560 = vrot.lane.b32.xlu0 %v558, 64
  %v561 = vpop.permute.xlu0 %560
  %v563 = vmul.f32 %v527, %v561
  %565 = vrot.lane.b32.xlu0 %v557, 32
  %v566 = vpop.permute.xlu0 %565
  %569 = vrot.lane.b32.xlu0 %v563, 64
  %v570 = vpop.permute.xlu0 %569
  %v572 = vsel %vm231, %v566, %v570
  %v573 = vpack.c.bf16 %v572, %v572
  %v575 = vsel %vm113, %v573, 0
  %577 = vmatprep.subr.bf16.mxu0 0
  %578 = vmatpush1.bf16.msra.mxu0 0
  %579 = vmatprep.subr.bf16.mxu0 0
  %580 = vmatpush1.bf16.msra.mxu0 0
  %581 = vmatprep.subr.bf16.mxu0 0
  %582 = vmatpush1.bf16.msra.mxu0 0
  %583 = vmatprep.subr.bf16.mxu0 0
  %584 = vmatpush1.bf16.msra.mxu0 0
  %585 = vmatprep.subr.bf16.mxu0 %v357
  %586 = vmatpush1.bf16.msra.mxu0 %v356
  %587 = vmatprep.subr.bf16.mxu0 %v355
  %588 = vmatpush1.bf16.msra.mxu0 %v354
  %589 = vmatprep.subr.bf16.mxu0 %v353
  %590 = vmatpush1.bf16.msra.mxu0 %v352
  %591 = vmatprep.subr.bf16.mxu0 %v351
  %592 = vmatpush1.bf16.msra.mxu0 %v350
  %593 = vmatprep.subr.bf16.mxu0 0
  %594 = vmatpush2.bf16.msra.mxu0 0
  %595 = vmatprep.subr.bf16.mxu0 0
  %596 = vmatpush2.bf16.msra.mxu0 0
  %597 = vmatprep.subr.bf16.mxu0 0
  %598 = vmatpush2.bf16.msra.mxu0 0
  %599 = vmatprep.subr.bf16.mxu0 0
  %600 = vmatpush2.bf16.msra.mxu0 0
  %601 = vmatprep.subr.bf16.mxu0 0
  %602 = vmatpush2.bf16.msra.mxu0 0
  %603 = vmatprep.subr.bf16.mxu0 0
  %604 = vmatpush2.bf16.msra.mxu0 0
  %605 = vmatprep.subr.bf16.mxu0 0
  %606 = vmatpush2.bf16.msra.mxu0 0
  %607 = vmatprep.subr.bf16.mxu0 0
  %608 = vmatpush2.bf16.msra.mxu0 0
  %609 = vmatprep.mubr.bf16.mxu0 0
  %610 = vmatmul.mubr.bf16.gmra.mxu0 %v575
  %v611 = vpop.f32.mrf.mxu0
  %v612 = vadd.f32 0.0, %v611
  %v613 = vpop.f32.mrf.mxu0
  %v614 = vadd.f32 0.0, %v613
  %v615 = vpop.f32.mrf.mxu0
  %v616 = vpop.f32.mrf.mxu0
  %617 = vdwg.mxu0
  %v618 = vadd.f32 %v289, %v612
  %v619 = vadd.f32 %v305, %v614
  %v620 = vxor.u32 %v618, 2147483648
  %v621 = vxor.u32 %v619, 2147483648
  %v622 = vmul.f32 %v620, 1.442695
  %v623 = vpow.pop %v622
  %v624 = vmul.f32 %v621, 1.442695
  %v625 = vpow.pop %v624
  %v626 = vadd.f32 %v623, 1.0
  %v627 = vadd.f32 %v625, 1.0
  %v628 = vrcp.pop %v626
  %v629 = vmul.f32 1.0, %v628
  %v630 = vrcp.pop %v627
  %v631 = vmul.f32 1.0, %v630
  %v632 = vtanh.pop %v618
  %v633 = vtanh.pop %v619
  %v634 = vmul.f32 %v629, %v540
  %636 = vrot.lane.b32.xlu0 %v632, 64
  %v637 = vpop.permute.xlu0 %636
  %v639 = vmul.f32 %v629, %v637
  %641 = vrot.lane.b32.xlu0 %v639, 32
  %v642 = vpop.permute.xlu0 %641
  %v644 = vadd.f32 %v634, %v642
  %v645 = vmul.f32 %v631, %v551
  %647 = vrot.lane.b32.xlu0 %v633, 64
  %v648 = vpop.permute.xlu0 %647
  %v650 = vmul.f32 %v631, %v648
  %652 = vrot.lane.b32.xlu0 %v650, 32
  %v653 = vpop.permute.xlu0 %652
  %v655 = vadd.f32 %v645, %v653
  %v656 = vtanh.pop %v644
  %658 = vrot.lane.b32.xlu0 %v656, 64
  %v659 = vpop.permute.xlu0 %658
  %v661 = vmul.f32 %v629, %v659
  %v662 = vtanh.pop %v655
  %664 = vrot.lane.b32.xlu0 %v662, 64
  %v665 = vpop.permute.xlu0 %664
  %v667 = vmul.f32 %v631, %v665
  %669 = vrot.lane.b32.xlu0 %v661, 32
  %v670 = vpop.permute.xlu0 %669
  %673 = vrot.lane.b32.xlu0 %v667, 64
  %v674 = vpop.permute.xlu0 %673
  %v676 = vsel %vm231, %v670, %v674
  %v677 = vpack.c.bf16 %v676, %v676
  %v679 = vsel %vm113, %v677, 0
  %681 = vmatprep.subr.bf16.mxu0 0
  %682 = vmatpush1.bf16.msra.mxu0 0
  %683 = vmatprep.subr.bf16.mxu0 0
  %684 = vmatpush1.bf16.msra.mxu0 0
  %685 = vmatprep.subr.bf16.mxu0 0
  %686 = vmatpush1.bf16.msra.mxu0 0
  %687 = vmatprep.subr.bf16.mxu0 0
  %688 = vmatpush1.bf16.msra.mxu0 0
  %689 = vmatprep.subr.bf16.mxu0 %v357
  %690 = vmatpush1.bf16.msra.mxu0 %v356
  %691 = vmatprep.subr.bf16.mxu0 %v355
  %692 = vmatpush1.bf16.msra.mxu0 %v354
  %693 = vmatprep.subr.bf16.mxu0 %v353
  %694 = vmatpush1.bf16.msra.mxu0 %v352
  %695 = vmatprep.subr.bf16.mxu0 %v351
  %696 = vmatpush1.bf16.msra.mxu0 %v350
  %697 = vmatprep.subr.bf16.mxu0 0
  %698 = vmatpush2.bf16.msra.mxu0 0
  %699 = vmatprep.subr.bf16.mxu0 0
  %700 = vmatpush2.bf16.msra.mxu0 0
  %701 = vmatprep.subr.bf16.mxu0 0
  %702 = vmatpush2.bf16.msra.mxu0 0
  %703 = vmatprep.subr.bf16.mxu0 0
  %704 = vmatpush2.bf16.msra.mxu0 0
  %705 = vmatprep.subr.bf16.mxu0 0
  %706 = vmatpush2.bf16.msra.mxu0 0
  %707 = vmatprep.subr.bf16.mxu0 0
  %708 = vmatpush2.bf16.msra.mxu0 0
  %709 = vmatprep.subr.bf16.mxu0 0
  %710 = vmatpush2.bf16.msra.mxu0 0
  %711 = vmatprep.subr.bf16.mxu0 0
  %712 = vmatpush2.bf16.msra.mxu0 0
  %713 = vmatprep.mubr.bf16.mxu0 0
  %714 = vmatmul.mubr.bf16.gmra.mxu0 %v679
  %v715 = vpop.f32.mrf.mxu0
  %v716 = vadd.f32 0.0, %v715
  %v717 = vpop.f32.mrf.mxu0
  %v718 = vadd.f32 0.0, %v717
  %v719 = vpop.f32.mrf.mxu0
  %v720 = vpop.f32.mrf.mxu0
  %721 = vdwg.mxu0
  %v722 = vadd.f32 %v293, %v716
  %v723 = vadd.f32 %v301, %v718
  %v724 = vxor.u32 %v722, 2147483648
  %v725 = vxor.u32 %v723, 2147483648
  %v726 = vmul.f32 %v724, 1.442695
  %v727 = vpow.pop %v726
  %v728 = vmul.f32 %v725, 1.442695
  %v729 = vpow.pop %v728
  %v730 = vadd.f32 %v727, 1.0
  %v731 = vadd.f32 %v729, 1.0
  %v732 = vrcp.pop %v730
  %v733 = vmul.f32 1.0, %v732
  %v734 = vrcp.pop %v731
  %v735 = vmul.f32 1.0, %v734
  %v736 = vtanh.pop %v722
  %v737 = vtanh.pop %v723
  %v738 = vmul.f32 %v733, %v644
  %740 = vrot.lane.b32.xlu0 %v736, 64
  %v741 = vpop.permute.xlu0 %740
  %v743 = vmul.f32 %v733, %v741
  %745 = vrot.lane.b32.xlu0 %v743, 32
  %v746 = vpop.permute.xlu0 %745
  %v748 = vadd.f32 %v738, %v746
  %v749 = vmul.f32 %v735, %v655
  %751 = vrot.lane.b32.xlu0 %v737, 64
  %v752 = vpop.permute.xlu0 %751
  %v754 = vmul.f32 %v735, %v752
  %756 = vrot.lane.b32.xlu0 %v754, 32
  %v757 = vpop.permute.xlu0 %756
  %v759 = vadd.f32 %v749, %v757
  %v760 = vtanh.pop %v748
  %762 = vrot.lane.b32.xlu0 %v760, 64
  %v763 = vpop.permute.xlu0 %762
  %v765 = vmul.f32 %v733, %v763
  %v766 = vtanh.pop %v759
  %768 = vrot.lane.b32.xlu0 %v766, 64
  %v769 = vpop.permute.xlu0 %768
  %v771 = vmul.f32 %v735, %v769
  %773 = vrot.lane.b32.xlu0 %v765, 32
  %v774 = vpop.permute.xlu0 %773
  %777 = vrot.lane.b32.xlu0 %v771, 64
  %v778 = vpop.permute.xlu0 %777
  %v780 = vsel %vm231, %v774, %v778
  %v781 = vpack.c.bf16 %v780, %v780
  %v783 = vsel %vm113, %v781, 0
  %785 = vmatprep.subr.bf16.mxu0 0
  %786 = vmatpush1.bf16.msra.mxu0 0
  %787 = vmatprep.subr.bf16.mxu0 0
  %788 = vmatpush1.bf16.msra.mxu0 0
  %789 = vmatprep.subr.bf16.mxu0 0
  %790 = vmatpush1.bf16.msra.mxu0 0
  %791 = vmatprep.subr.bf16.mxu0 0
  %792 = vmatpush1.bf16.msra.mxu0 0
  %793 = vmatprep.subr.bf16.mxu0 %v357
  %794 = vmatpush1.bf16.msra.mxu0 %v356
  %795 = vmatprep.subr.bf16.mxu0 %v355
  %796 = vmatpush1.bf16.msra.mxu0 %v354
  %797 = vmatprep.subr.bf16.mxu0 %v353
  %798 = vmatpush1.bf16.msra.mxu0 %v352
  %799 = vmatprep.subr.bf16.mxu0 %v351
  %800 = vmatpush1.bf16.msra.mxu0 %v350
  %801 = vmatprep.subr.bf16.mxu0 0
  %802 = vmatpush2.bf16.msra.mxu0 0
  %803 = vmatprep.subr.bf16.mxu0 0
  %804 = vmatpush2.bf16.msra.mxu0 0
  %805 = vmatprep.subr.bf16.mxu0 0
  %806 = vmatpush2.bf16.msra.mxu0 0
  %807 = vmatprep.subr.bf16.mxu0 0
  %808 = vmatpush2.bf16.msra.mxu0 0
  %809 = vmatprep.subr.bf16.mxu0 0
  %810 = vmatpush2.bf16.msra.mxu0 0
  %811 = vmatprep.subr.bf16.mxu0 0
  %812 = vmatpush2.bf16.msra.mxu0 0
  %813 = vmatprep.subr.bf16.mxu0 0
  %814 = vmatpush2.bf16.msra.mxu0 0
  %815 = vmatprep.subr.bf16.mxu0 0
  %816 = vmatpush2.bf16.msra.mxu0 0
  %817 = vmatprep.mubr.bf16.mxu0 0
  %818 = vmatmul.mubr.bf16.gmra.mxu0 %v783
  %v819 = vpop.f32.mrf.mxu0
  %v820 = vadd.f32 0.0, %v819
  %v821 = vpop.f32.mrf.mxu0
  %v822 = vadd.f32 0.0, %v821
  %v823 = vpop.f32.mrf.mxu0
  %v824 = vpop.f32.mrf.mxu0
  %825 = vdwg.mxu0
  %v826 = vadd.f32 %v299, %v820
  %v827 = vadd.f32 %v295, %v822
  %v828 = vxor.u32 %v826, 2147483648
  %v829 = vxor.u32 %v827, 2147483648
  %v830 = vmul.f32 %v828, 1.442695
  %v831 = vpow.pop %v830
  %v832 = vmul.f32 %v829, 1.442695
  %v833 = vpow.pop %v832
  %v834 = vadd.f32 %v831, 1.0
  %v835 = vadd.f32 %v833, 1.0
  %v836 = vrcp.pop %v834
  %v837 = vmul.f32 1.0, %v836
  %v838 = vrcp.pop %v835
  %v839 = vmul.f32 1.0, %v838
  %v840 = vtanh.pop %v826
  %v841 = vtanh.pop %v827
  %v842 = vmul.f32 %v837, %v748
  %844 = vrot.lane.b32.xlu0 %v840, 64
  %v845 = vpop.permute.xlu0 %844
  %v847 = vmul.f32 %v837, %v845
  %849 = vrot.lane.b32.xlu0 %v847, 32
  %v850 = vpop.permute.xlu0 %849
  %v852 = vadd.f32 %v842, %v850
  %v853 = vmul.f32 %v839, %v759
  %855 = vrot.lane.b32.xlu0 %v841, 64
  %v856 = vpop.permute.xlu0 %855
  %v858 = vmul.f32 %v839, %v856
  %860 = vrot.lane.b32.xlu0 %v858, 32
  %v861 = vpop.permute.xlu0 %860
  %v863 = vadd.f32 %v853, %v861
  %v864 = vtanh.pop %v852
  %866 = vrot.lane.b32.xlu0 %v864, 64
  %v867 = vpop.permute.xlu0 %866
  %v869 = vmul.f32 %v837, %v867
  %v870 = vtanh.pop %v863
  %872 = vrot.lane.b32.xlu0 %v870, 64
  %v873 = vpop.permute.xlu0 %872
  %v875 = vmul.f32 %v839, %v873
  %877 = vrot.lane.b32.xlu0 %v869, 32
  %v878 = vpop.permute.xlu0 %877
  %881 = vrot.lane.b32.xlu0 %v875, 64
  %v882 = vpop.permute.xlu0 %881
  %v884 = vsel %vm231, %v878, %v882
  %v885 = vpack.c.bf16 %v884, %v884
  %v887 = vsel %vm113, %v885, 0
  %889 = vmatprep.subr.bf16.mxu0 0
  %890 = vmatpush1.bf16.msra.mxu0 0
  %891 = vmatprep.subr.bf16.mxu0 0
  %892 = vmatpush1.bf16.msra.mxu0 0
  %893 = vmatprep.subr.bf16.mxu0 0
  %894 = vmatpush1.bf16.msra.mxu0 0
  %895 = vmatprep.subr.bf16.mxu0 0
  %896 = vmatpush1.bf16.msra.mxu0 0
  %897 = vmatprep.subr.bf16.mxu0 %v357
  %898 = vmatpush1.bf16.msra.mxu0 %v356
  %899 = vmatprep.subr.bf16.mxu0 %v355
  %900 = vmatpush1.bf16.msra.mxu0 %v354
  %901 = vmatprep.subr.bf16.mxu0 %v353
  %902 = vmatpush1.bf16.msra.mxu0 %v352
  %903 = vmatprep.subr.bf16.mxu0 %v351
  %904 = vmatpush1.bf16.msra.mxu0 %v350
  %905 = vmatprep.subr.bf16.mxu0 0
  %906 = vmatpush2.bf16.msra.mxu0 0
  %907 = vmatprep.subr.bf16.mxu0 0
  %908 = vmatpush2.bf16.msra.mxu0 0
  %909 = vmatprep.subr.bf16.mxu0 0
  %910 = vmatpush2.bf16.msra.mxu0 0
  %911 = vmatprep.subr.bf16.mxu0 0
  %912 = vmatpush2.bf16.msra.mxu0 0
  %913 = vmatprep.subr.bf16.mxu0 0
  %914 = vmatpush2.bf16.msra.mxu0 0
  %915 = vmatprep.subr.bf16.mxu0 0
  %916 = vmatpush2.bf16.msra.mxu0 0
  %917 = vmatprep.subr.bf16.mxu0 0
  %918 = vmatpush2.bf16.msra.mxu0 0
  %919 = vmatprep.subr.bf16.mxu0 0
  %920 = vmatpush2.bf16.msra.mxu0 0
  %921 = vmatprep.mubr.bf16.mxu0 0
  %922 = vmatmul.mubr.bf16.gmra.mxu0 %v887
  %v923 = vpop.f32.mrf.mxu0
  %v924 = vadd.f32 0.0, %v923
  %v925 = vpop.f32.mrf.mxu0
  %v926 = vadd.f32 0.0, %v925
  %v927 = vpop.f32.mrf.mxu0
  %v928 = vpop.f32.mrf.mxu0
  %929 = vdwg.mxu0
  %v930 = vadd.f32 %v303, %v924
  %v931 = vadd.f32 %v291, %v926
  %v932 = vxor.u32 %v930, 2147483648
  %v933 = vxor.u32 %v931, 2147483648
  %v934 = vmul.f32 %v932, 1.442695
  %v935 = vpow.pop %v934
  %v936 = vmul.f32 %v933, 1.442695
  %v937 = vpow.pop %v936
  %v938 = vadd.f32 %v935, 1.0
  %v939 = vadd.f32 %v937, 1.0
  %v940 = vrcp.pop %v938
  %v941 = vmul.f32 1.0, %v940
  %v942 = vrcp.pop %v939
  %v943 = vmul.f32 1.0, %v942
  %v944 = vtanh.pop %v930
  %v945 = vtanh.pop %v931
  %v946 = vmul.f32 %v941, %v852
  %948 = vrot.lane.b32.xlu0 %v944, 64
  %v949 = vpop.permute.xlu0 %948
  %v951 = vmul.f32 %v941, %v949
  %953 = vrot.lane.b32.xlu0 %v951, 32
  %v954 = vpop.permute.xlu0 %953
  %v956 = vadd.f32 %v946, %v954
  %v957 = vmul.f32 %v943, %v863
  %959 = vrot.lane.b32.xlu0 %v945, 64
  %v960 = vpop.permute.xlu0 %959
  %v962 = vmul.f32 %v943, %v960
  %964 = vrot.lane.b32.xlu0 %v962, 32
  %v965 = vpop.permute.xlu0 %964
  %v967 = vadd.f32 %v957, %v965
  %v968 = vtanh.pop %v956
  %970 = vrot.lane.b32.xlu0 %v968, 64
  %v971 = vpop.permute.xlu0 %970
  %v973 = vmul.f32 %v941, %v971
  %v974 = vtanh.pop %v967
  %976 = vrot.lane.b32.xlu0 %v974, 64
  %v977 = vpop.permute.xlu0 %976
  %v979 = vmul.f32 %v943, %v977
  %981 = vrot.lane.b32.xlu0 %v973, 32
  %v982 = vpop.permute.xlu0 %981
  %985 = vrot.lane.b32.xlu0 %v979, 64
  %v986 = vpop.permute.xlu0 %985
  %v988 = vsel %vm231, %v982, %v986
  %v989 = vpack.c.bf16 %v988, %v988
  %v991 = vsel %vm113, %v989, 0
  %993 = vmatprep.subr.bf16.mxu0 0
  %994 = vmatpush1.bf16.msra.mxu0 0
  %995 = vmatprep.subr.bf16.mxu0 0
  %996 = vmatpush1.bf16.msra.mxu0 0
  %997 = vmatprep.subr.bf16.mxu0 0
  %998 = vmatpush1.bf16.msra.mxu0 0
  %999 = vmatprep.subr.bf16.mxu0 0
  %1000 = vmatpush1.bf16.msra.mxu0 0
  %1001 = vmatprep.subr.bf16.mxu0 %v357
  %1002 = vmatpush1.bf16.msra.mxu0 %v356
  %1003 = vmatprep.subr.bf16.mxu0 %v355
  %1004 = vmatpush1.bf16.msra.mxu0 %v354
  %1005 = vmatprep.subr.bf16.mxu0 %v353
  %1006 = vmatpush1.bf16.msra.mxu0 %v352
  %1007 = vmatprep.subr.bf16.mxu0 %v351
  %1008 = vmatpush1.bf16.msra.mxu0 %v350
  %1009 = vmatprep.subr.bf16.mxu0 0
  %1010 = vmatpush2.bf16.msra.mxu0 0
  %1011 = vmatprep.subr.bf16.mxu0 0
  %1012 = vmatpush2.bf16.msra.mxu0 0
  %1013 = vmatprep.subr.bf16.mxu0 0
  %1014 = vmatpush2.bf16.msra.mxu0 0
  %1015 = vmatprep.subr.bf16.mxu0 0
  %1016 = vmatpush2.bf16.msra.mxu0 0
  %1017 = vmatprep.subr.bf16.mxu0 0
  %1018 = vmatpush2.bf16.msra.mxu0 0
  %1019 = vmatprep.subr.bf16.mxu0 0
  %1020 = vmatpush2.bf16.msra.mxu0 0
  %1021 = vmatprep.subr.bf16.mxu0 0
  %1022 = vmatpush2.bf16.msra.mxu0 0
  %1023 = vmatprep.subr.bf16.mxu0 0
  %1024 = vmatpush2.bf16.msra.mxu0 0
  %1025 = vmatprep.mubr.bf16.mxu0 0
  %1026 = vmatmul.mubr.bf16.gmra.mxu0 %v991
  %v1027 = vpop.f32.mrf.mxu0
  %v1028 = vadd.f32 0.0, %v1027
  %v1029 = vpop.f32.mrf.mxu0
  %v1030 = vadd.f32 0.0, %v1029
  %v1031 = vpop.f32.mrf.mxu0
  %v1032 = vpop.f32.mrf.mxu0
  %1033 = vdwg.mxu0
  %v1034 = vadd.f32 %v309, %v1028
  %v1035 = vadd.f32 %v285, %v1030
  %v1036 = vxor.u32 %v1034, 2147483648
  %v1037 = vxor.u32 %v1035, 2147483648
  %v1038 = vmul.f32 %v1036, 1.442695
  %v1039 = vpow.pop %v1038
  %v1040 = vmul.f32 %v1037, 1.442695
  %v1041 = vpow.pop %v1040
  %v1042 = vadd.f32 %v1039, 1.0
  %v1043 = vadd.f32 %v1041, 1.0
  %v1044 = vrcp.pop %v1042
  %v1045 = vmul.f32 1.0, %v1044
  %v1046 = vrcp.pop %v1043
  %v1047 = vmul.f32 1.0, %v1046
  %v1048 = vtanh.pop %v1034
  %v1049 = vtanh.pop %v1035
  %v1050 = vmul.f32 %v1045, %v956
  %1052 = vrot.lane.b32.xlu0 %v1048, 64
  %v1053 = vpop.permute.xlu0 %1052
  %v1055 = vmul.f32 %v1045, %v1053
  %1057 = vrot.lane.b32.xlu0 %v1055, 32
  %v1058 = vpop.permute.xlu0 %1057
  %v1060 = vadd.f32 %v1050, %v1058
  %v1061 = vmul.f32 %v1047, %v967
  %1063 = vrot.lane.b32.xlu0 %v1049, 64
  %v1064 = vpop.permute.xlu0 %1063
  %v1066 = vmul.f32 %v1047, %v1064
  %1068 = vrot.lane.b32.xlu0 %v1066, 32
  %v1069 = vpop.permute.xlu0 %1068
  %v1071 = vadd.f32 %v1061, %v1069
  %v1072 = vtanh.pop %v1060
  %1074 = vrot.lane.b32.xlu0 %v1072, 64
  %v1075 = vpop.permute.xlu0 %1074
  %v1077 = vmul.f32 %v1045, %v1075
  %v1078 = vtanh.pop %v1071
  %1080 = vrot.lane.b32.xlu0 %v1078, 64
  %v1081 = vpop.permute.xlu0 %1080
  %v1083 = vmul.f32 %v1047, %v1081
  %1085 = vrot.lane.b32.xlu0 %v1077, 32
  %v1086 = vpop.permute.xlu0 %1085
  %1089 = vrot.lane.b32.xlu0 %v1083, 64
  %v1090 = vpop.permute.xlu0 %1089
  %v1092 = vsel %vm231, %v1086, %v1090
  %v1093 = vpack.c.bf16 %v1092, %v1092
  %v1095 = vsel %vm113, %v1093, 0
  %1097 = vmatprep.subr.bf16.mxu0 0
  %1098 = vmatpush1.bf16.msra.mxu0 0
  %1099 = vmatprep.subr.bf16.mxu0 0
  %1100 = vmatpush1.bf16.msra.mxu0 0
  %1101 = vmatprep.subr.bf16.mxu0 0
  %1102 = vmatpush1.bf16.msra.mxu0 0
  %1103 = vmatprep.subr.bf16.mxu0 0
  %1104 = vmatpush1.bf16.msra.mxu0 0
  %1105 = vmatprep.subr.bf16.mxu0 %v357
  %1106 = vmatpush1.bf16.msra.mxu0 %v356
  %1107 = vmatprep.subr.bf16.mxu0 %v355
  %1108 = vmatpush1.bf16.msra.mxu0 %v354
  %1109 = vmatprep.subr.bf16.mxu0 %v353
  %1110 = vmatpush1.bf16.msra.mxu0 %v352
  %1111 = vmatprep.subr.bf16.mxu0 %v351
  %1112 = vmatpush1.bf16.msra.mxu0 %v350
  %1113 = vmatprep.subr.bf16.mxu0 0
  %1114 = vmatpush2.bf16.msra.mxu0 0
  %1115 = vmatprep.subr.bf16.mxu0 0
  %1116 = vmatpush2.bf16.msra.mxu0 0
  %1117 = vmatprep.subr.bf16.mxu0 0
  %1118 = vmatpush2.bf16.msra.mxu0 0
  %1119 = vmatprep.subr.bf16.mxu0 0
  %1120 = vmatpush2.bf16.msra.mxu0 0
  %1121 = vmatprep.subr.bf16.mxu0 0
  %1122 = vmatpush2.bf16.msra.mxu0 0
  %1123 = vmatprep.subr.bf16.mxu0 0
  %1124 = vmatpush2.bf16.msra.mxu0 0
  %1125 = vmatprep.subr.bf16.mxu0 0
  %1126 = vmatpush2.bf16.msra.mxu0 0
  %1127 = vmatprep.subr.bf16.mxu0 0
  %1128 = vmatpush2.bf16.msra.mxu0 0
  %1129 = vmatprep.mubr.bf16.mxu0 0
  %1130 = vmatmul.mubr.bf16.gmra.mxu0 %v1095
  %v1131 = vpop.f32.mrf.mxu0
  %v1132 = vadd.f32 0.0, %v1131
  %v1133 = vpop.f32.mrf.mxu0
  %v1134 = vadd.f32 0.0, %v1133
  %v1135 = vpop.f32.mrf.mxu0
  %v1136 = vpop.f32.mrf.mxu0
  %1137 = vdwg.mxu0
  %v1138 = vadd.f32 %v313, %v1132
  %v1139 = vadd.f32 %v281, %v1134
  %v1140 = vxor.u32 %v1138, 2147483648
  %v1141 = vxor.u32 %v1139, 2147483648
  %v1142 = vmul.f32 %v1140, 1.442695
  %v1143 = vpow.pop %v1142
  %v1144 = vmul.f32 %v1141, 1.442695
  %v1145 = vpow.pop %v1144
  %v1146 = vadd.f32 %v1143, 1.0
  %v1147 = vadd.f32 %v1145, 1.0
  %v1148 = vrcp.pop %v1146
  %v1149 = vmul.f32 1.0, %v1148
  %v1150 = vrcp.pop %v1147
  %v1151 = vmul.f32 1.0, %v1150
  %v1152 = vtanh.pop %v1138
  %v1153 = vtanh.pop %v1139
  %v1154 = vmul.f32 %v1149, %v1060
  %1156 = vrot.lane.b32.xlu0 %v1152, 64
  %v1157 = vpop.permute.xlu0 %1156
  %v1159 = vmul.f32 %v1149, %v1157
  %1161 = vrot.lane.b32.xlu0 %v1159, 32
  %v1162 = vpop.permute.xlu0 %1161
  %v1164 = vadd.f32 %v1154, %v1162
  %v1165 = vmul.f32 %v1151, %v1071
  %1167 = vrot.lane.b32.xlu0 %v1153, 64
  %v1168 = vpop.permute.xlu0 %1167
  %v1170 = vmul.f32 %v1151, %v1168
  %1172 = vrot.lane.b32.xlu0 %v1170, 32
  %v1173 = vpop.permute.xlu0 %1172
  %v1175 = vadd.f32 %v1165, %v1173
  %v1176 = vtanh.pop %v1164
  %1178 = vrot.lane.b32.xlu0 %v1176, 64
  %v1179 = vpop.permute.xlu0 %1178
  %v1181 = vmul.f32 %v1149, %v1179
  %v1182 = vtanh.pop %v1175
  %1184 = vrot.lane.b32.xlu0 %v1182, 64
  %v1185 = vpop.permute.xlu0 %1184
  %v1187 = vmul.f32 %v1151, %v1185
  %1189 = vrot.lane.b32.xlu0 %v1181, 32
  %v1190 = vpop.permute.xlu0 %1189
  %1193 = vrot.lane.b32.xlu0 %v1187, 64
  %v1194 = vpop.permute.xlu0 %1193
  %v1196 = vsel %vm231, %v1190, %v1194
  %v1197 = vld [vmem:[%s5] sm:$0xff]
  %v1198 = vld [vmem:[%s5 + $0x8] sm:$0xff]
  %v1199 = vld [vmem:[%s5 + $0x10] sm:$0xff]
  %v1200 = vld [vmem:[%s5 + $0x18] sm:$0xff]
  %v1201 = vld [vmem:[%s5 + $0x20] sm:$0xff]
  %v1202 = vld [vmem:[%s5 + $0x28] sm:$0xff]
  %v1203 = vld [vmem:[%s5 + $0x30] sm:$0xff]
  %v1204 = vld [vmem:[%s5 + $0x38] sm:$0xff]
  %v1205 = vld [vmem:[%s6] sm:$0x1]
  %v1207 = vlaneseq
  %v1208 = vshrl.u32 %v1207, 7
  %v1209 = vsub.s32 0, %v1208
  %v1210 = vrot.slane %v1205, %v1209
  %v1213 = vsel %vm113, %v1196, 0
  %1215 = vmatprep.subr.mxu0 0.0
  %1216 = vmatpush1.msra.mxu0 0.0
  %1217 = vmatprep.subr.mxu0 0.0
  %1218 = vmatpush1.msra.mxu0 0.0
  %1219 = vmatprep.subr.mxu0 0.0
  %1220 = vmatpush1.msra.mxu0 0.0
  %1221 = vmatprep.subr.mxu0 0.0
  %1222 = vmatpush1.msra.mxu0 0.0
  %1223 = vmatprep.subr.mxu0 0.0
  %1224 = vmatpush1.msra.mxu0 0.0
  %1225 = vmatprep.subr.mxu0 0.0
  %1226 = vmatpush1.msra.mxu0 0.0
  %1227 = vmatprep.subr.mxu0 0.0
  %1228 = vmatpush1.msra.mxu0 0.0
  %1229 = vmatprep.subr.mxu0 0.0
  %1230 = vmatpush1.msra.mxu0 0.0
  %1231 = vmatprep.subr.mxu0 0.0
  %1232 = vmatpush1.msra.mxu0 %v1204
  %1233 = vmatprep.subr.mxu0 0.0
  %1234 = vmatpush1.msra.mxu0 %v1203
  %1235 = vmatprep.subr.mxu0 0.0
  %1236 = vmatpush1.msra.mxu0 %v1202
  %1237 = vmatprep.subr.mxu0 0.0
  %1238 = vmatpush1.msra.mxu0 %v1201
  %1239 = vmatprep.subr.mxu0 0.0
  %1240 = vmatpush1.msra.mxu0 %v1200
  %1241 = vmatprep.subr.mxu0 0.0
  %1242 = vmatpush1.msra.mxu0 %v1199
  %1243 = vmatprep.subr.mxu0 0.0
  %1244 = vmatpush1.msra.mxu0 %v1198
  %1245 = vmatprep.subr.mxu0 0.0
  %1246 = vmatpush1.msra.mxu0 %v1197
  %1247 = vmatprep.subr.mxu0 0.0
  %1248 = vmatpush2.msra.mxu0 0.0
  %1249 = vmatprep.subr.mxu0 0.0
  %1250 = vmatpush2.msra.mxu0 0.0
  %1251 = vmatprep.subr.mxu0 0.0
  %1252 = vmatpush2.msra.mxu0 0.0
  %1253 = vmatprep.subr.mxu0 0.0
  %1254 = vmatpush2.msra.mxu0 0.0
  %1255 = vmatprep.subr.mxu0 0.0
  %1256 = vmatpush2.msra.mxu0 0.0
  %1257 = vmatprep.subr.mxu0 0.0
  %1258 = vmatpush2.msra.mxu0 0.0
  %1259 = vmatprep.subr.mxu0 0.0
  %1260 = vmatpush2.msra.mxu0 0.0
  %1261 = vmatprep.subr.mxu0 0.0
  %1262 = vmatpush2.msra.mxu0 0.0
  %1263 = vmatprep.subr.mxu0 0.0
  %1264 = vmatpush2.msra.mxu0 0.0
  %1265 = vmatprep.subr.mxu0 0.0
  %1266 = vmatpush2.msra.mxu0 0.0
  %1267 = vmatprep.subr.mxu0 0.0
  %1268 = vmatpush2.msra.mxu0 0.0
  %1269 = vmatprep.subr.mxu0 0.0
  %1270 = vmatpush2.msra.mxu0 0.0
  %1271 = vmatprep.subr.mxu0 0.0
  %1272 = vmatpush2.msra.mxu0 0.0
  %1273 = vmatprep.subr.mxu0 0.0
  %1274 = vmatpush2.msra.mxu0 0.0
  %1275 = vmatprep.subr.mxu0 0.0
  %1276 = vmatpush2.msra.mxu0 0.0
  %1277 = vmatprep.subr.mxu0 0.0
  %1278 = vmatpush2.msra.mxu0 0.0
  %1279 = vmatprep.mubr.f32.mxu0 0.0
  %1280 = vmatmul.mubr.f32.gmra.mxu0 %v1213
  %v1281 = vpop.f32.mrf.mxu0
  %v1282 = vadd.f32 %v1210, %v1281
  %v1283 = vpop.f32.mrf.mxu0
  %1284 = vdwg.mxu0
  %v1285 = vxor.u32 %v1282, 2147483648
  %v1286 = vmul.f32 %v1285, 1.442695
  %v1287 = vpow.pop %v1286
  %v1288 = vadd.f32 %v1287, 1.0
  %v1289 = vrcp.pop %v1288
  %v1290 = vmul.f32 1.0, %v1289
  %1291 = vst [vmem:[%s7] sm:$0xff] %v1290
  // Predicated region
  $region30: #{brnn_forward.1} parent=0 // pred_check
    _
  $region31: #{brnn_forward.1} parent=0 // pred_check_branch
    %1293 = sbr.rel (0) target = $region33
  $region32: #{brnn_forward.1} parent=0 // pred_region
    _
  $region33: #{brnn_forward.1} parent=0 // pred_fallthru
    _
  // Predicated region
  $region34: #{brnn_forward.1} parent=0 // pred_check
    _
  $region35: #{brnn_forward.1} parent=0 // pred_check_branch
    %1295 = sbr.rel (0) target = $region37
  $region36: #{brnn_forward.1} parent=0 // pred_region
    _
  $region37: #{brnn_forward.1} parent=0 // pred_fallthru
    _

</llo_original>
